<compile_context>
chip_gen: v5e
topology: v5e:2x2
jax: 0.10.0
libtpu: 0.0.40
codegen_flags: <defaults>
</compile_context>

<pallas_src>
import jax
import jax.numpy as jnp
from jax.experimental import pallas as pl
from jax.experimental.pallas import tpu as pltpu

EPS = 1e-5
NEG_SLOPE = 0.1
LANE = 128


def _round_up(x, m):
    return (x + m - 1) // m * m


def _bn_train(u, gamma, beta):
    """Training-mode BatchNorm1d: per-feature batch stats, biased centered variance (f32)."""
    mu = jnp.mean(u, axis=0, keepdims=True)
    d = u - mu
    var = jnp.mean(d * d, axis=0, keepdims=True)
    return d * jax.lax.rsqrt(var + EPS) * gamma + beta


def _leaky(u):
    return jnp.where(u > 0, u, NEG_SLOPE * u)


def discriminator_kernel(x_ref, w1_ref, ss1_ref, w2_ref, ss2_ref, w3_ref, b3_ref, out_ref):
    """Single-invocation fused forward (no grid; everything resident in VMEM).

    x_ref  : (N, Fp)     bf16  lane-dense padded input
    w1_ref : (Fp, H1p)   bf16  Linear1 weight, (in, out) layout
    ss1_ref: (2, H1p)    f32   row 0 = gamma1, row 1 = beta1
    w2_ref : (H1p, H2p)  bf16  Linear2 weight, (in, out) layout
    ss2_ref: (2, H2p)    f32   row 0 = gamma2, row 1 = beta2
    w3_ref : (H2p, OUTp) bf16  classifier weight, (in, out) layout
    b3_ref : (1, OUTp)   f32   classifier bias
    out_ref: (N, OUTp)   f32   lane-dense output
    """
    x = x_ref[...]

    # ---- Layer 1: Linear -> BatchNorm1d (batch stats) -> LeakyReLU(0.1).
    # The Linear bias is omitted: a per-feature constant added before train-mode
    # BatchNorm is exactly cancelled by the mean subtraction (mathematical no-op).
    u1 = jnp.dot(x, w1_ref[...], preferred_element_type=jnp.float32)     # f32 (N, H1p)
    ss1 = ss1_ref[...]
    h1 = _leaky(_bn_train(u1, ss1[0:1, :], ss1[1:2, :]))
    # TODO(synk): nn.Dropout(p=0.5) is applied as identity (eval semantics) to keep the
    # forward deterministic; stochastic train-mode dropout would need
    # pltpu.prng_seed + pltpu.stateful_bernoulli and a 1/(1-p) rescale.

    # ---- Layer 2: Linear -> BatchNorm1d -> LeakyReLU (bias again cancelled by BN).
    u2 = jnp.dot(h1.astype(jnp.bfloat16), w2_ref[...],
                 preferred_element_type=jnp.float32)                     # f32 (N, H2p)
    ss2 = ss2_ref[...]
    h2 = _leaky(_bn_train(u2, ss2[0:1, :], ss2[1:2, :]))

    # ---- Classifier.
    out_ref[...] = (jnp.dot(h2.astype(jnp.bfloat16), w3_ref[...],
                            preferred_element_type=jnp.float32)
                    + b3_ref[...]).astype(out_ref.dtype)


def make_discriminator(w1, b1, g1, be1, w2, b2, g2, be2, w3, b3):
    """One-time parameter preparation + jitted forward closure.

    All padding to lane-dense multiples of 128, (out,in)->(in,out) transposes,
    bf16 casts and gamma/beta packing happen HERE, once — not on the per-call path.
    Linear weights are in PyTorch layout (out_features, in_features).
    """
    F = w1.shape[1]
    H1, H2, OUT = w1.shape[0], w2.shape[0], w3.shape[0]
    Fp, H1p, H2p, OUTp = (_round_up(d, LANE) for d in (F, H1, H2, OUT))

    bf16, f32 = jnp.bfloat16, jnp.float32

    def pad2(a, rows, cols, dtype):
        return jnp.pad(a.astype(dtype), ((0, rows - a.shape[0]), (0, cols - a.shape[1])))

    w1p = pad2(w1.T, Fp, H1p, bf16)      # (Fp, H1p)
    w2p = pad2(w2.T, H1p, H2p, bf16)     # (H1p, H2p)
    w3p = pad2(w3.T, H2p, OUTp, bf16)    # (H2p, OUTp)

    def pack_ss(g, be, n):               # pack gamma/beta into one (2, n) f32 array
        return jnp.stack([jnp.pad(g.astype(f32), (0, n - g.shape[0])),
                          jnp.pad(be.astype(f32), (0, n - be.shape[0]))])

    ss1 = pack_ss(g1, be1, H1p)
    ss2 = pack_ss(g2, be2, H2p)
    b3p = jnp.pad(b3.astype(f32), (0, OUTp - OUT)).reshape(1, OUTp)
    # b1 / b2 are intentionally unused: bias before training-mode BatchNorm is a no-op.
    del b1, b2

    vmem_spec = pl.BlockSpec(memory_space=pltpu.MemorySpace.VMEM)

    @jax.jit
    def forward(x):
        N = x.shape[0]
        xp = x.astype(bf16)
        if Fp != F:
            xp = jnp.pad(xp, ((0, 0), (0, Fp - F)))
        out_p = pl.pallas_call(
            discriminator_kernel,
            out_shape=jax.ShapeDtypeStruct((N, OUTp), f32),
            in_specs=[vmem_spec] * 7,
            out_specs=vmem_spec,
            compiler_params=pltpu.CompilerParams(
                # ~1.5 MiB of bf16 weights + tiny activations; explicit limit so a
                # much larger num_features can't silently trip v5e's 16 MiB default.
                vmem_limit_bytes=32 * 1024 * 1024,
            ),
        )(xp, w1p, ss1, w2p, ss2, w3p, b3p)
        # TODO(synk): for large batches (N >~ 64) add a batch grid axis and switch BN
        # to sum / sum-of-squares partial statistics instead of holding (N, H1p) f32 live.
        return out_p[:, :OUT]

    return forward


# ----------------------------- references (for the self-test) -----------------------------

def _reference_f32(x, w1, b1, g1, be1, w2, b2, g2, be2, w3, b3):
    """Pure f32 JAX mirror of the PyTorch module (train-mode BN, eval dropout)."""
    def bn(y, g, b):
        mu = jnp.mean(y, axis=0, keepdims=True)
        var = jnp.mean((y - mu) ** 2, axis=0, keepdims=True)      # biased
        return (y - mu) / jnp.sqrt(var + EPS) * g + b

    h = _leaky(bn(x @ w1.T + b1, g1, be1))
    h = _leaky(bn(h @ w2.T + b2, g2, be2))
    return h @ w3.T + b3


def _reference_bf16(x, w1, g1, be1, w2, g2, be2, w3, b3):
    """Same numerical model as the kernel: bf16 matmul operands, f32 accumulation/BN."""
    bf16 = jnp.bfloat16

    def dot(a, b):
        return jnp.dot(a.astype(bf16), b.astype(bf16), preferred_element_type=jnp.float32)

    h = _leaky(_bn_train(dot(x, w1.T), g1[None, :], be1[None, :]))
    h = _leaky(_bn_train(dot(h, w2.T), g2[None, :], be2[None, :]))
    return dot(h, w3.T) + b3[None, :]


if __name__ == "__main__":
    # Small shapes consistent with Discriminator(num_features=64); 1000/500/2 are fixed
    # by the module; batch must be >= 2 for training-mode BatchNorm1d.
    N, F = 8, 64
    H1, H2, OUT = 1000, 500, 2

    key = jax.random.PRNGKey(0)
    ks = jax.random.split(key, 11)
    x = jax.random.normal(ks[0], (N, F), jnp.float32)
    w1 = jax.random.normal(ks[1], (H1, F), jnp.float32) * (2.0 / F) ** 0.5
    b1 = 0.1 * jax.random.normal(ks[2], (H1,), jnp.float32)
    g1 = 1.0 + 0.1 * jax.random.normal(ks[3], (H1,), jnp.float32)
    be1 = 0.1 * jax.random.normal(ks[4], (H1,), jnp.float32)
    w2 = jax.random.normal(ks[5], (H2, H1), jnp.float32) * (2.0 / H1) ** 0.5
    b2 = 0.1 * jax.random.normal(ks[6], (H2,), jnp.float32)
    g2 = 1.0 + 0.1 * jax.random.normal(ks[7], (H2,), jnp.float32)
    be2 = 0.1 * jax.random.normal(ks[8], (H2,), jnp.float32)
    w3 = jax.random.normal(ks[9], (OUT, H2), jnp.float32) * (1.0 / H2) ** 0.5
    b3 = 0.1 * jax.random.normal(ks[10], (OUT,), jnp.float32)

    forward = make_discriminator(w1, b1, g1, be1, w2, b2, g2, be2, w3, b3)
    out = jax.block_until_ready(forward(x))

    ref_bf16 = jax.block_until_ready(
        _reference_bf16(x, w1, g1, be1, w2, g2, be2, w3, b3))
    ref_f32 = jax.block_until_ready(
        _reference_f32(x, w1, b1, g1, be1, w2, b2, g2, be2, w3, b3))

    assert out.shape == (N, OUT)
    # Exact-model check: identical bf16-operand / f32-accumulation arithmetic as the kernel.
    assert jnp.allclose(out, ref_bf16, rtol=2e-3, atol=2e-3), \
        f"max abs err vs bf16-model ref {float(jnp.max(jnp.abs(out - ref_bf16)))}"
    # Against the full-f32 module reference only bf16 operand rounding separates the two.
    assert jnp.allclose(out, ref_f32, rtol=1e-1, atol=1e-1), \
        f"max abs err vs f32 ref {float(jnp.max(jnp.abs(out - ref_f32)))}"

    print("KERNEL_OK")
</pallas_src>

<mosaic_0001>
module attributes {stable_mosaic.version = 11 : i64} {
  func.func @discriminator_kernel(%arg0: memref<8x128xbf16, #tpu.memory_space<vmem>>, %arg1: memref<128x1024xbf16, #tpu.memory_space<vmem>>, %arg2: memref<2x1024xf32, #tpu.memory_space<vmem>>, %arg3: memref<1024x512xbf16, #tpu.memory_space<vmem>>, %arg4: memref<2x512xf32, #tpu.memory_space<vmem>>, %arg5: memref<512x128xbf16, #tpu.memory_space<vmem>>, %arg6: memref<1x128xf32, #tpu.memory_space<vmem>>, %arg7: memref<8x128xf32, #tpu.memory_space<vmem>>) attributes {dimension_semantics = [], scalar_prefetch = 0 : i64, scratch_operands = 0 : i64, tpu.core_type = #tpu.core_type<tc>} {
    %c0 = arith.constant 0 : index
    %c0_0 = arith.constant 0 : index
    %0 = vector.load %arg0[%c0, %c0_0] : memref<8x128xbf16, #tpu.memory_space<vmem>>, vector<8x128xbf16>
    %c0_1 = arith.constant 0 : index
    %c0_2 = arith.constant 0 : index
    %1 = vector.load %arg1[%c0_1, %c0_2] : memref<128x1024xbf16, #tpu.memory_space<vmem>>, vector<128x1024xbf16>
    %cst = arith.constant dense<0.000000e+00> : vector<8x1024xf32>
    %2 = tpu.matmul %0, %1, %cst {dimension_numbers = #tpu.dot_dimension_numbers<[1], [0], [0], [1], [0, 0, 1, 1], [], []>} : vector<8x128xbf16>, vector<128x1024xbf16>, vector<8x1024xf32> -> vector<8x1024xf32>
    %c0_3 = arith.constant 0 : index
    %c0_4 = arith.constant 0 : index
    %3 = vector.load %arg2[%c0_3, %c0_4] : memref<2x1024xf32, #tpu.memory_space<vmem>>, vector<2x1024xf32>
    %4 = vector.extract_strided_slice %3 {offsets = [0, 0], sizes = [1, 1024], strides = [1, 1]} : vector<2x1024xf32> to vector<1x1024xf32>
    %5 = vector.extract_strided_slice %3 {offsets = [1, 0], sizes = [1, 1024], strides = [1, 1]} : vector<2x1024xf32> to vector<1x1024xf32>
    %cst_5 = arith.constant dense<0.000000e+00> : vector<1024xf32>
    %6 = vector.multi_reduction <add>, %2, %cst_5 [0] : vector<8x1024xf32> to vector<1024xf32>
    %7 = vector.shape_cast %6 : vector<1024xf32> to vector<1x1024xf32>
    %cst_6 = arith.constant 8.000000e+00 : f32
    %8 = vector.broadcast %cst_6 : f32 to vector<1x1024xf32>
    %9 = arith.divf %7, %8 : vector<1x1024xf32>
    %10 = vector.broadcast %9 : vector<1x1024xf32> to vector<8x1024xf32>
    %11 = arith.subf %2, %10 : vector<8x1024xf32>
    %12 = arith.mulf %11, %11 : vector<8x1024xf32>
    %cst_7 = arith.constant dense<0.000000e+00> : vector<1024xf32>
    %13 = vector.multi_reduction <add>, %12, %cst_7 [0] : vector<8x1024xf32> to vector<1024xf32>
    %14 = vector.shape_cast %13 : vector<1024xf32> to vector<1x1024xf32>
    %cst_8 = arith.constant 8.000000e+00 : f32
    %15 = vector.broadcast %cst_8 : f32 to vector<1x1024xf32>
    %16 = arith.divf %14, %15 : vector<1x1024xf32>
    %cst_9 = arith.constant 9.99999974E-6 : f32
    %17 = vector.broadcast %cst_9 : f32 to vector<1x1024xf32>
    %18 = arith.addf %16, %17 : vector<1x1024xf32>
    %19 = math.rsqrt %18 : vector<1x1024xf32>
    %20 = vector.broadcast %19 : vector<1x1024xf32> to vector<8x1024xf32>
    %21 = arith.mulf %11, %20 : vector<8x1024xf32>
    %22 = vector.broadcast %4 : vector<1x1024xf32> to vector<8x1024xf32>
    %23 = arith.mulf %21, %22 : vector<8x1024xf32>
    %24 = vector.broadcast %5 : vector<1x1024xf32> to vector<8x1024xf32>
    %25 = arith.addf %23, %24 : vector<8x1024xf32>
    %cst_10 = arith.constant 0.000000e+00 : f32
    %26 = vector.broadcast %cst_10 : f32 to vector<8x1024xf32>
    %27 = arith.cmpf ogt, %25, %26 : vector<8x1024xf32>
    %cst_11 = arith.constant 1.000000e-01 : f32
    %28 = vector.broadcast %cst_11 : f32 to vector<8x1024xf32>
    %29 = arith.mulf %28, %25 : vector<8x1024xf32>
    %30 = arith.select %27, %25, %29 : vector<8x1024xi1>, vector<8x1024xf32>
    %31 = arith.truncf %30 : vector<8x1024xf32> to vector<8x1024xbf16>
    %c0_12 = arith.constant 0 : index
    %c0_13 = arith.constant 0 : index
    %32 = vector.load %arg3[%c0_12, %c0_13] : memref<1024x512xbf16, #tpu.memory_space<vmem>>, vector<1024x512xbf16>
    %cst_14 = arith.constant dense<0.000000e+00> : vector<8x512xf32>
    %33 = tpu.matmul %31, %32, %cst_14 {dimension_numbers = #tpu.dot_dimension_numbers<[1], [0], [0], [1], [0, 0, 1, 1], [], []>} : vector<8x1024xbf16>, vector<1024x512xbf16>, vector<8x512xf32> -> vector<8x512xf32>
    %c0_15 = arith.constant 0 : index
    %c0_16 = arith.constant 0 : index
    %34 = vector.load %arg4[%c0_15, %c0_16] : memref<2x512xf32, #tpu.memory_space<vmem>>, vector<2x512xf32>
    %35 = vector.extract_strided_slice %34 {offsets = [0, 0], sizes = [1, 512], strides = [1, 1]} : vector<2x512xf32> to vector<1x512xf32>
    %36 = vector.extract_strided_slice %34 {offsets = [1, 0], sizes = [1, 512], strides = [1, 1]} : vector<2x512xf32> to vector<1x512xf32>
    %cst_17 = arith.constant dense<0.000000e+00> : vector<512xf32>
    %37 = vector.multi_reduction <add>, %33, %cst_17 [0] : vector<8x512xf32> to vector<512xf32>
    %38 = vector.shape_cast %37 : vector<512xf32> to vector<1x512xf32>
    %cst_18 = arith.constant 8.000000e+00 : f32
    %39 = vector.broadcast %cst_18 : f32 to vector<1x512xf32>
    %40 = arith.divf %38, %39 : vector<1x512xf32>
    %41 = vector.broadcast %40 : vector<1x512xf32> to vector<8x512xf32>
    %42 = arith.subf %33, %41 : vector<8x512xf32>
    %43 = arith.mulf %42, %42 : vector<8x512xf32>
    %cst_19 = arith.constant dense<0.000000e+00> : vector<512xf32>
    %44 = vector.multi_reduction <add>, %43, %cst_19 [0] : vector<8x512xf32> to vector<512xf32>
    %45 = vector.shape_cast %44 : vector<512xf32> to vector<1x512xf32>
    %cst_20 = arith.constant 8.000000e+00 : f32
    %46 = vector.broadcast %cst_20 : f32 to vector<1x512xf32>
    %47 = arith.divf %45, %46 : vector<1x512xf32>
    %cst_21 = arith.constant 9.99999974E-6 : f32
    %48 = vector.broadcast %cst_21 : f32 to vector<1x512xf32>
    %49 = arith.addf %47, %48 : vector<1x512xf32>
    %50 = math.rsqrt %49 : vector<1x512xf32>
    %51 = vector.broadcast %50 : vector<1x512xf32> to vector<8x512xf32>
    %52 = arith.mulf %42, %51 : vector<8x512xf32>
    %53 = vector.broadcast %35 : vector<1x512xf32> to vector<8x512xf32>
    %54 = arith.mulf %52, %53 : vector<8x512xf32>
    %55 = vector.broadcast %36 : vector<1x512xf32> to vector<8x512xf32>
    %56 = arith.addf %54, %55 : vector<8x512xf32>
    %cst_22 = arith.constant 0.000000e+00 : f32
    %57 = vector.broadcast %cst_22 : f32 to vector<8x512xf32>
    %58 = arith.cmpf ogt, %56, %57 : vector<8x512xf32>
    %cst_23 = arith.constant 1.000000e-01 : f32
    %59 = vector.broadcast %cst_23 : f32 to vector<8x512xf32>
    %60 = arith.mulf %59, %56 : vector<8x512xf32>
    %61 = arith.select %58, %56, %60 : vector<8x512xi1>, vector<8x512xf32>
    %62 = arith.truncf %61 : vector<8x512xf32> to vector<8x512xbf16>
    %c0_24 = arith.constant 0 : index
    %c0_25 = arith.constant 0 : index
    %63 = vector.load %arg5[%c0_24, %c0_25] : memref<512x128xbf16, #tpu.memory_space<vmem>>, vector<512x128xbf16>
    %cst_26 = arith.constant dense<0.000000e+00> : vector<8x128xf32>
    %64 = tpu.matmul %62, %63, %cst_26 {dimension_numbers = #tpu.dot_dimension_numbers<[1], [0], [0], [1], [0, 0, 1, 1], [], []>} : vector<8x512xbf16>, vector<512x128xbf16>, vector<8x128xf32> -> vector<8x128xf32>
    %c0_27 = arith.constant 0 : index
    %c0_28 = arith.constant 0 : index
    %65 = vector.load %arg6[%c0_27, %c0_28] : memref<1x128xf32, #tpu.memory_space<vmem>>, vector<1x128xf32>
    %66 = vector.broadcast %65 : vector<1x128xf32> to vector<8x128xf32>
    %67 = arith.addf %64, %66 : vector<8x128xf32>
    %c0_29 = arith.constant 0 : index
    %c0_30 = arith.constant 0 : index
    %68 = vector.load %arg7[%c0_29, %c0_30] : memref<8x128xf32, #tpu.memory_space<vmem>>, vector<8x128xf32>
    tpu.vector_store %arg7[%c0_29, %c0_30], %67 {strides = array<i32>} : memref<8x128xf32, #tpu.memory_space<vmem>>, vector<8x128xf32>,
    return
  }
}

</mosaic_0001>

<llo_original>
// kernel: forward.1
$region0: #{forward.1}
  #allocation0 [shape = 'u32[]', space=smem, size = 0x4, offset = 0x4, fixed_abs, tag = 'smem constant byte address 0x4 - core index']
  #allocation1 [shape = 'u32[72,128]{1,0:T(1,128)}', space=vmem, size = 0x9000, scoped, tag = 'internal scratch']
  %s0 = inlined_call_operand.vmem [shape: bf16[8,128], index: 0, kind: input, shape index: {}]
  %s1 = inlined_call_operand.hbm [shape: bf16[128,1024], index: 1, kind: input, shape index: {}]
  %s2 = inlined_call_operand.vmem [shape: f32[2,1024], index: 2, kind: input, shape index: {}]
  %s3 = inlined_call_operand.hbm [shape: bf16[1024,512], index: 3, kind: input, shape index: {}]
  %s4 = inlined_call_operand.vmem [shape: f32[2,512], index: 4, kind: input, shape index: {}]
  %s5 = inlined_call_operand.hbm [shape: bf16[512,128], index: 5, kind: input, shape index: {}]
  %s6 = inlined_call_operand.vmem [shape: f32[1,128], index: 6, kind: input, shape index: {}]
  %s7 = inlined_call_operand.vmem [shape: f32[8,128], index: 7, kind: output, shape index: {}]
  %s8 = sld [smem:[#allocation0]]
  $region50: #{forward.1} parent=0
    _
  %s10 = ssub.s32 1, %s8
  %s11 = scalar_select 0, %s10, %s8
  $region1: #{forward.1} parent=0
    #allocation2 [shape = 'u8[262144]{0}', space=vmem, size = 0x40000, scoped, tag = 'input window, operand 1, single buffered']
    #allocation3 [shape = 's32[1]{0}', space=sflag, size = 0x4, scoped, tag = 'scoped memory for forward.1']
    #allocation4 [shape = 'u8[1048576]{0}', space=vmem, size = 0x100000, scoped, tag = 'input window, operand 3, single buffered']
    #allocation5 [shape = 's32[1]{0}', space=sflag, size = 0x4, scoped, tag = 'scoped memory for forward.1']
    #allocation6 [shape = 'u8[131072]{0}', space=vmem, size = 0x20000, scoped, tag = 'input window, operand 5, single buffered']
    %12 = vsyncpa [#allocation3], 0
    %13 = vsyncpa [#allocation5], 0
    // Predicated region
    $region2: #{forward.1} parent=1 // pred_check
      _
    $region3: #{forward.1} parent=1 // pred_check_branch
      %15 = sbr.rel (0) target = $region5
    $region4: #{forward.1} parent=1 // pred_region
      _
    $region5: #{forward.1} parent=1 // pred_fallthru
      _
    // Predicated region
    $region6: #{forward.1} parent=1 // pred_check
      _
    $region7: #{forward.1} parent=1 // pred_check_branch
      %17 = sbr.rel (0) target = $region9
    $region8: #{forward.1} parent=1 // pred_region
      %19 = vsyncadd [#allocation3], 0
      %s20 = sshll.u32 %s1, 4
      %s21 = int_to_ptr.hbm [resolvable:$true] %s20
      %s22 = sshll.u32 [#allocation2], 4
      %s23 = int_to_ptr.vmem [resolvable:$true] %s22
      %28 = dma.hbm_to_vmem [thread:$0]  %s21, 8192, %s23, [#allocation3], 512, 512, 32
    $region9: #{forward.1} parent=1 // pred_fallthru
      _
    // Predicated region
    $region10: #{forward.1} parent=1 // pred_check
      _
    $region11: #{forward.1} parent=1 // pred_check_branch
      %30 = sbr.rel (0) target = $region13
    $region12: #{forward.1} parent=1 // pred_region
      _
    $region13: #{forward.1} parent=1 // pred_fallthru
      _
    // Predicated region
    $region14: #{forward.1} parent=1 // pred_check
      _
    $region15: #{forward.1} parent=1 // pred_check_branch
      %32 = sbr.rel (0) target = $region17
    $region16: #{forward.1} parent=1 // pred_region
      %34 = vsyncadd [#allocation5], 0
      %s35 = sshll.u32 %s3, 4
      %s36 = int_to_ptr.hbm [resolvable:$true] %s35
      %s37 = sshll.u32 [#allocation4], 4
      %s38 = int_to_ptr.vmem [resolvable:$true] %s37
      %43 = dma.hbm_to_vmem [thread:$0]  %s36, 32768, %s38, [#allocation5], 256, 256, 16
    $region17: #{forward.1} parent=1 // pred_fallthru
      _
    // Predicated region
    $region18: #{forward.1} parent=1 // pred_check
      _
    $region19: #{forward.1} parent=1 // pred_check_branch
      %45 = sbr.rel (0) target = $region21
    $region20: #{forward.1} parent=1 // pred_region
      _
    $region21: #{forward.1} parent=1 // pred_fallthru
      _
    // Predicated region
    $region22: #{forward.1} parent=1 // pred_check
      _
    $region23: #{forward.1} parent=1 // pred_check_branch
      %47 = sbr.rel (0) target = $region25
    $region24: #{forward.1} parent=1 // pred_region
      %49 = vsyncadd [#allocation5], 0
      %s50 = sshll.u32 %s5, 4
      %s51 = int_to_ptr.hbm [resolvable:$true] %s50
      %s52 = sshll.u32 [#allocation6], 4
      %s53 = int_to_ptr.vmem [resolvable:$true] %s52
      %58 = dma.hbm_to_vmem [thread:$0]  %s51, 4096, %s53, [#allocation5], 64, 64, 4
    $region25: #{forward.1} parent=1 // pred_fallthru
      _
    // Predicated region
    $region26: #{forward.1} parent=1 // pred_check
      _
    $region27: #{forward.1} parent=1 // pred_check_branch
      %60 = sbr.rel (0) target = $region29
    $region28: #{forward.1} parent=1 // pred_region
      _
    $region29: #{forward.1} parent=1 // pred_fallthru
      _
    // Predicated region
    $region30: #{forward.1} parent=1 // pred_check
      _
    $region31: #{forward.1} parent=1 // pred_check_branch
      %62 = sbr.rel (0) target = $region33
    $region32: #{forward.1} parent=1 // pred_region
      %64 = dma.done [#allocation3], 8192
    $region33: #{forward.1} parent=1 // pred_fallthru
      _
    // Predicated region
    $region34: #{forward.1} parent=1 // pred_check
      _
    $region35: #{forward.1} parent=1 // pred_check_branch
      %66 = sbr.rel (0) target = $region37
    $region36: #{forward.1} parent=1 // pred_region
      %68 = dma.done [#allocation5], 32768
    $region37: #{forward.1} parent=1 // pred_fallthru
      _
    // Predicated region
    $region38: #{forward.1} parent=1 // pred_check
      _
    $region39: #{forward.1} parent=1 // pred_check_branch
      %70 = sbr.rel (0) target = $region41
    $region40: #{forward.1} parent=1 // pred_region
      %72 = dma.done [#allocation5], 4096
    $region41: #{forward.1} parent=1 // pred_fallthru
      _
    %v73 = vld [vmem:[%s0] sm:$0xf]
    %v74 = vld [vmem:[#allocation2] sm:$0xff]
    %v75 = vld [vmem:[#allocation2 + $0x8] sm:$0xff]
    %v76 = vld [vmem:[#allocation2 + $0x10] sm:$0xff]
    %v77 = vld [vmem:[#allocation2 + $0x18] sm:$0xff]
    %v78 = vld [vmem:[#allocation2 + $0x20] sm:$0xff]
    %v79 = vld [vmem:[#allocation2 + $0x28] sm:$0xff]
    %v80 = vld [vmem:[#allocation2 + $0x30] sm:$0xff]
    %v81 = vld [vmem:[#allocation2 + $0x38] sm:$0xff]
    %v82 = vld [vmem:[#allocation2 + $0x40] sm:$0xff]
    %v83 = vld [vmem:[#allocation2 + $0x48] sm:$0xff]
    %v84 = vld [vmem:[#allocation2 + $0x50] sm:$0xff]
    %v85 = vld [vmem:[#allocation2 + $0x58] sm:$0xff]
    %v86 = vld [vmem:[#allocation2 + $0x60] sm:$0xff]
    %v87 = vld [vmem:[#allocation2 + $0x68] sm:$0xff]
    %v88 = vld [vmem:[#allocation2 + $0x70] sm:$0xff]
    %v89 = vld [vmem:[#allocation2 + $0x78] sm:$0xff]
    %v90 = vld [vmem:[#allocation2 + $0x80] sm:$0xff]
    %v91 = vld [vmem:[#allocation2 + $0x88] sm:$0xff]
    %v92 = vld [vmem:[#allocation2 + $0x90] sm:$0xff]
    %v93 = vld [vmem:[#allocation2 + $0x98] sm:$0xff]
    %v94 = vld [vmem:[#allocation2 + $0xa0] sm:$0xff]
    %v95 = vld [vmem:[#allocation2 + $0xa8] sm:$0xff]
    %v96 = vld [vmem:[#allocation2 + $0xb0] sm:$0xff]
    %v97 = vld [vmem:[#allocation2 + $0xb8] sm:$0xff]
    %v98 = vld [vmem:[#allocation2 + $0xc0] sm:$0xff]
    %v99 = vld [vmem:[#allocation2 + $0xc8] sm:$0xff]
    %v100 = vld [vmem:[#allocation2 + $0xd0] sm:$0xff]
    %v101 = vld [vmem:[#allocation2 + $0xd8] sm:$0xff]
    %v102 = vld [vmem:[#allocation2 + $0xe0] sm:$0xff]
    %v103 = vld [vmem:[#allocation2 + $0xe8] sm:$0xff]
    %v104 = vld [vmem:[#allocation2 + $0xf0] sm:$0xff]
    %v105 = vld [vmem:[#allocation2 + $0xf8] sm:$0xff]
    %v106 = vld [vmem:[#allocation2 + $0x100] sm:$0xff]
    %v107 = vld [vmem:[#allocation2 + $0x108] sm:$0xff]
    %v108 = vld [vmem:[#allocation2 + $0x110] sm:$0xff]
    %v109 = vld [vmem:[#allocation2 + $0x118] sm:$0xff]
    %v110 = vld [vmem:[#allocation2 + $0x120] sm:$0xff]
    %v111 = vld [vmem:[#allocation2 + $0x128] sm:$0xff]
    %v112 = vld [vmem:[#allocation2 + $0x130] sm:$0xff]
    %v113 = vld [vmem:[#allocation2 + $0x138] sm:$0xff]
    %v114 = vld [vmem:[#allocation2 + $0x140] sm:$0xff]
    %v115 = vld [vmem:[#allocation2 + $0x148] sm:$0xff]
    %v116 = vld [vmem:[#allocation2 + $0x150] sm:$0xff]
    %v117 = vld [vmem:[#allocation2 + $0x158] sm:$0xff]
    %v118 = vld [vmem:[#allocation2 + $0x160] sm:$0xff]
    %v119 = vld [vmem:[#allocation2 + $0x168] sm:$0xff]
    %v120 = vld [vmem:[#allocation2 + $0x170] sm:$0xff]
    %v121 = vld [vmem:[#allocation2 + $0x178] sm:$0xff]
    %v122 = vld [vmem:[#allocation2 + $0x180] sm:$0xff]
    %v123 = vld [vmem:[#allocation2 + $0x188] sm:$0xff]
    %v124 = vld [vmem:[#allocation2 + $0x190] sm:$0xff]
    %v125 = vld [vmem:[#allocation2 + $0x198] sm:$0xff]
    %v126 = vld [vmem:[#allocation2 + $0x1a0] sm:$0xff]
    %v127 = vld [vmem:[#allocation2 + $0x1a8] sm:$0xff]
    %v128 = vld [vmem:[#allocation2 + $0x1b0] sm:$0xff]
    %v129 = vld [vmem:[#allocation2 + $0x1b8] sm:$0xff]
    %v130 = vld [vmem:[#allocation2 + $0x1c0] sm:$0xff]
    %v131 = vld [vmem:[#allocation2 + $0x1c8] sm:$0xff]
    %v132 = vld [vmem:[#allocation2 + $0x1d0] sm:$0xff]
    %v133 = vld [vmem:[#allocation2 + $0x1d8] sm:$0xff]
    %v134 = vld [vmem:[#allocation2 + $0x1e0] sm:$0xff]
    %v135 = vld [vmem:[#allocation2 + $0x1e8] sm:$0xff]
    %v136 = vld [vmem:[#allocation2 + $0x1f0] sm:$0xff]
    %v137 = vld [vmem:[#allocation2 + $0x1f8] sm:$0xff]
    %v202 = vunpack.c.l.b16 %v74
    %v203 = vunpack.c.h.b16 %v74
    %v204 = vunpack.c.l.b16 %v75
    %v205 = vunpack.c.h.b16 %v75
    %v206 = vunpack.c.l.b16 %v76
    %v207 = vunpack.c.h.b16 %v76
    %v208 = vunpack.c.l.b16 %v77
    %v209 = vunpack.c.h.b16 %v77
    %v210 = vunpack.c.l.b16 %v78
    %v211 = vunpack.c.h.b16 %v78
    %v212 = vunpack.c.l.b16 %v79
    %v213 = vunpack.c.h.b16 %v79
    %v214 = vunpack.c.l.b16 %v80
    %v215 = vunpack.c.h.b16 %v80
    %v216 = vunpack.c.l.b16 %v81
    %v217 = vunpack.c.h.b16 %v81
    %v218 = vunpack.c.l.b16 %v82
    %v219 = vunpack.c.h.b16 %v82
    %v220 = vunpack.c.l.b16 %v83
    %v221 = vunpack.c.h.b16 %v83
    %v222 = vunpack.c.l.b16 %v84
    %v223 = vunpack.c.h.b16 %v84
    %v224 = vunpack.c.l.b16 %v85
    %v225 = vunpack.c.h.b16 %v85
    %v226 = vunpack.c.l.b16 %v86
    %v227 = vunpack.c.h.b16 %v86
    %v228 = vunpack.c.l.b16 %v87
    %v229 = vunpack.c.h.b16 %v87
    %v230 = vunpack.c.l.b16 %v88
    %v231 = vunpack.c.h.b16 %v88
    %v232 = vunpack.c.l.b16 %v89
    %v233 = vunpack.c.h.b16 %v89
    %v234 = vunpack.c.l.b16 %v90
    %v235 = vunpack.c.h.b16 %v90
    %v236 = vunpack.c.l.b16 %v91
    %v237 = vunpack.c.h.b16 %v91
    %v238 = vunpack.c.l.b16 %v92
    %v239 = vunpack.c.h.b16 %v92
    %v240 = vunpack.c.l.b16 %v93
    %v241 = vunpack.c.h.b16 %v93
    %v242 = vunpack.c.l.b16 %v94
    %v243 = vunpack.c.h.b16 %v94
    %v244 = vunpack.c.l.b16 %v95
    %v245 = vunpack.c.h.b16 %v95
    %v246 = vunpack.c.l.b16 %v96
    %v247 = vunpack.c.h.b16 %v96
    %v248 = vunpack.c.l.b16 %v97
    %v249 = vunpack.c.h.b16 %v97
    %v250 = vunpack.c.l.b16 %v98
    %v251 = vunpack.c.h.b16 %v98
    %v252 = vunpack.c.l.b16 %v99
    %v253 = vunpack.c.h.b16 %v99
    %v254 = vunpack.c.l.b16 %v100
    %v255 = vunpack.c.h.b16 %v100
    %v256 = vunpack.c.l.b16 %v101
    %v257 = vunpack.c.h.b16 %v101
    %v258 = vunpack.c.l.b16 %v102
    %v259 = vunpack.c.h.b16 %v102
    %v260 = vunpack.c.l.b16 %v103
    %v261 = vunpack.c.h.b16 %v103
    %v262 = vunpack.c.l.b16 %v104
    %v263 = vunpack.c.h.b16 %v104
    %v264 = vunpack.c.l.b16 %v105
    %v265 = vunpack.c.h.b16 %v105
    %v266 = vunpack.c.l.b16 %v106
    %v267 = vunpack.c.h.b16 %v106
    %v268 = vunpack.c.l.b16 %v107
    %v269 = vunpack.c.h.b16 %v107
    %v270 = vunpack.c.l.b16 %v108
    %v271 = vunpack.c.h.b16 %v108
    %v272 = vunpack.c.l.b16 %v109
    %v273 = vunpack.c.h.b16 %v109
    %v274 = vunpack.c.l.b16 %v110
    %v275 = vunpack.c.h.b16 %v110
    %v276 = vunpack.c.l.b16 %v111
    %v277 = vunpack.c.h.b16 %v111
    %v278 = vunpack.c.l.b16 %v112
    %v279 = vunpack.c.h.b16 %v112
    %v280 = vunpack.c.l.b16 %v113
    %v281 = vunpack.c.h.b16 %v113
    %v282 = vunpack.c.l.b16 %v114
    %v283 = vunpack.c.h.b16 %v114
    %v284 = vunpack.c.l.b16 %v115
    %v285 = vunpack.c.h.b16 %v115
    %v286 = vunpack.c.l.b16 %v116
    %v287 = vunpack.c.h.b16 %v116
    %v288 = vunpack.c.l.b16 %v117
    %v289 = vunpack.c.h.b16 %v117
    %v290 = vunpack.c.l.b16 %v118
    %v291 = vunpack.c.h.b16 %v118
    %v292 = vunpack.c.l.b16 %v119
    %v293 = vunpack.c.h.b16 %v119
    %v294 = vunpack.c.l.b16 %v120
    %v295 = vunpack.c.h.b16 %v120
    %v296 = vunpack.c.l.b16 %v121
    %v297 = vunpack.c.h.b16 %v121
    %v298 = vunpack.c.l.b16 %v122
    %v299 = vunpack.c.h.b16 %v122
    %v300 = vunpack.c.l.b16 %v123
    %v301 = vunpack.c.h.b16 %v123
    %v302 = vunpack.c.l.b16 %v124
    %v303 = vunpack.c.h.b16 %v124
    %v304 = vunpack.c.l.b16 %v125
    %v305 = vunpack.c.h.b16 %v125
    %v306 = vunpack.c.l.b16 %v126
    %v307 = vunpack.c.h.b16 %v126
    %v308 = vunpack.c.l.b16 %v127
    %v309 = vunpack.c.h.b16 %v127
    %v310 = vunpack.c.l.b16 %v128
    %v311 = vunpack.c.h.b16 %v128
    %v312 = vunpack.c.l.b16 %v129
    %v313 = vunpack.c.h.b16 %v129
    %v314 = vunpack.c.l.b16 %v130
    %v315 = vunpack.c.h.b16 %v130
    %v316 = vunpack.c.l.b16 %v131
    %v317 = vunpack.c.h.b16 %v131
    %v318 = vunpack.c.l.b16 %v132
    %v319 = vunpack.c.h.b16 %v132
    %v320 = vunpack.c.l.b16 %v133
    %v321 = vunpack.c.h.b16 %v133
    %v322 = vunpack.c.l.b16 %v134
    %v323 = vunpack.c.h.b16 %v134
    %v324 = vunpack.c.l.b16 %v135
    %v325 = vunpack.c.h.b16 %v135
    %v326 = vunpack.c.l.b16 %v136
    %v327 = vunpack.c.h.b16 %v136
    %v328 = vunpack.c.l.b16 %v137
    %v329 = vunpack.c.h.b16 %v137
    %v330 = vpack.c.b16 %v210, %v202
    %v331 = vpack.c.b16 %v211, %v203
    %v332 = vpack.c.b16 %v212, %v204
    %v333 = vpack.c.b16 %v213, %v205
    %v334 = vpack.c.b16 %v214, %v206
    %v335 = vpack.c.b16 %v215, %v207
    %v336 = vpack.c.b16 %v216, %v208
    %v337 = vpack.c.b16 %v217, %v209
    %v338 = vpack.c.b16 %v226, %v218
    %v339 = vpack.c.b16 %v227, %v219
    %v340 = vpack.c.b16 %v228, %v220
    %v341 = vpack.c.b16 %v229, %v221
    %v342 = vpack.c.b16 %v230, %v222
    %v343 = vpack.c.b16 %v231, %v223
    %v344 = vpack.c.b16 %v232, %v224
    %v345 = vpack.c.b16 %v233, %v225
    %v346 = vpack.c.b16 %v242, %v234
    %v347 = vpack.c.b16 %v243, %v235
    %v348 = vpack.c.b16 %v244, %v236
    %v349 = vpack.c.b16 %v245, %v237
    %v350 = vpack.c.b16 %v246, %v238
    %v351 = vpack.c.b16 %v247, %v239
    %v352 = vpack.c.b16 %v248, %v240
    %v353 = vpack.c.b16 %v249, %v241
    %v354 = vpack.c.b16 %v258, %v250
    %v355 = vpack.c.b16 %v259, %v251
    %v356 = vpack.c.b16 %v260, %v252
    %v357 = vpack.c.b16 %v261, %v253
    %v358 = vpack.c.b16 %v262, %v254
    %v359 = vpack.c.b16 %v263, %v255
    %v360 = vpack.c.b16 %v264, %v256
    %v361 = vpack.c.b16 %v265, %v257
    %v362 = vpack.c.b16 %v274, %v266
    %v363 = vpack.c.b16 %v275, %v267
    %v364 = vpack.c.b16 %v276, %v268
    %v365 = vpack.c.b16 %v277, %v269
    %v366 = vpack.c.b16 %v278, %v270
    %v367 = vpack.c.b16 %v279, %v271
    %v368 = vpack.c.b16 %v280, %v272
    %v369 = vpack.c.b16 %v281, %v273
    %v370 = vpack.c.b16 %v290, %v282
    %v371 = vpack.c.b16 %v291, %v283
    %v372 = vpack.c.b16 %v292, %v284
    %v373 = vpack.c.b16 %v293, %v285
    %v374 = vpack.c.b16 %v294, %v286
    %v375 = vpack.c.b16 %v295, %v287
    %v376 = vpack.c.b16 %v296, %v288
    %v377 = vpack.c.b16 %v297, %v289
    %v378 = vpack.c.b16 %v306, %v298
    %v379 = vpack.c.b16 %v307, %v299
    %v380 = vpack.c.b16 %v308, %v300
    %v381 = vpack.c.b16 %v309, %v301
    %v382 = vpack.c.b16 %v310, %v302
    %v383 = vpack.c.b16 %v311, %v303
    %v384 = vpack.c.b16 %v312, %v304
    %v385 = vpack.c.b16 %v313, %v305
    %v386 = vpack.c.b16 %v322, %v314
    %v387 = vpack.c.b16 %v323, %v315
    %v388 = vpack.c.b16 %v324, %v316
    %v389 = vpack.c.b16 %v325, %v317
    %v390 = vpack.c.b16 %v326, %v318
    %v391 = vpack.c.b16 %v327, %v319
    %v392 = vpack.c.b16 %v328, %v320
    %v393 = vpack.c.b16 %v329, %v321
    %458 = vmatpush.bf16.msra.mxu0 %v386
    %459 = vmatpush.bf16.msra.mxu0 %v378
    %460 = vmatpush.bf16.msra.mxu0 %v370
    %461 = vmatpush.bf16.msra.mxu0 %v362
    %462 = vmatpush.bf16.msra.mxu0 %v354
    %463 = vmatpush.bf16.msra.mxu0 %v346
    %464 = vmatpush.bf16.msra.mxu0 %v338
    %465 = vmatpush.bf16.msra.mxu0 %v330
    %466 = vmatmul.bf16.gmra.mxu0 %v73
    %v467 = vpop.f32.mrf.mxu0
    %v468 = vadd.f32 0.0, %v467
    %v469 = vpop.f32.mrf.mxu0
    %470 = vdwg.mxu0
    %471 = vmatpush.bf16.msra.mxu0 %v387
    %472 = vmatpush.bf16.msra.mxu0 %v379
    %473 = vmatpush.bf16.msra.mxu0 %v371
    %474 = vmatpush.bf16.msra.mxu0 %v363
    %475 = vmatpush.bf16.msra.mxu0 %v355
    %476 = vmatpush.bf16.msra.mxu0 %v347
    %477 = vmatpush.bf16.msra.mxu0 %v339
    %478 = vmatpush.bf16.msra.mxu0 %v331
    %479 = vmatmul.bf16.gmra.mxu0 %v73
    %v480 = vpop.f32.mrf.mxu0
    %v481 = vadd.f32 0.0, %v480
    %v482 = vpop.f32.mrf.mxu0
    %483 = vdwg.mxu0
    %484 = vmatpush.bf16.msra.mxu0 %v388
    %485 = vmatpush.bf16.msra.mxu0 %v380
    %486 = vmatpush.bf16.msra.mxu0 %v372
    %487 = vmatpush.bf16.msra.mxu0 %v364
    %488 = vmatpush.bf16.msra.mxu0 %v356
    %489 = vmatpush.bf16.msra.mxu0 %v348
    %490 = vmatpush.bf16.msra.mxu0 %v340
    %491 = vmatpush.bf16.msra.mxu0 %v332
    %492 = vmatmul.bf16.gmra.mxu0 %v73
    %v493 = vpop.f32.mrf.mxu0
    %v494 = vadd.f32 0.0, %v493
    %v495 = vpop.f32.mrf.mxu0
    %496 = vdwg.mxu0
    %497 = vmatpush.bf16.msra.mxu0 %v389
    %498 = vmatpush.bf16.msra.mxu0 %v381
    %499 = vmatpush.bf16.msra.mxu0 %v373
    %500 = vmatpush.bf16.msra.mxu0 %v365
    %501 = vmatpush.bf16.msra.mxu0 %v357
    %502 = vmatpush.bf16.msra.mxu0 %v349
    %503 = vmatpush.bf16.msra.mxu0 %v341
    %504 = vmatpush.bf16.msra.mxu0 %v333
    %505 = vmatmul.bf16.gmra.mxu0 %v73
    %v506 = vpop.f32.mrf.mxu0
    %v507 = vadd.f32 0.0, %v506
    %v508 = vpop.f32.mrf.mxu0
    %509 = vdwg.mxu0
    %510 = vmatpush.bf16.msra.mxu0 %v390
    %511 = vmatpush.bf16.msra.mxu0 %v382
    %512 = vmatpush.bf16.msra.mxu0 %v374
    %513 = vmatpush.bf16.msra.mxu0 %v366
    %514 = vmatpush.bf16.msra.mxu0 %v358
    %515 = vmatpush.bf16.msra.mxu0 %v350
    %516 = vmatpush.bf16.msra.mxu0 %v342
    %517 = vmatpush.bf16.msra.mxu0 %v334
    %518 = vmatmul.bf16.gmra.mxu0 %v73
    %v519 = vpop.f32.mrf.mxu0
    %v520 = vadd.f32 0.0, %v519
    %v521 = vpop.f32.mrf.mxu0
    %522 = vdwg.mxu0
    %523 = vmatpush.bf16.msra.mxu0 %v391
    %524 = vmatpush.bf16.msra.mxu0 %v383
    %525 = vmatpush.bf16.msra.mxu0 %v375
    %526 = vmatpush.bf16.msra.mxu0 %v367
    %527 = vmatpush.bf16.msra.mxu0 %v359
    %528 = vmatpush.bf16.msra.mxu0 %v351
    %529 = vmatpush.bf16.msra.mxu0 %v343
    %530 = vmatpush.bf16.msra.mxu0 %v335
    %531 = vmatmul.bf16.gmra.mxu0 %v73
    %v532 = vpop.f32.mrf.mxu0
    %v533 = vadd.f32 0.0, %v532
    %v534 = vpop.f32.mrf.mxu0
    %535 = vdwg.mxu0
    %536 = vmatpush.bf16.msra.mxu0 %v392
    %537 = vmatpush.bf16.msra.mxu0 %v384
    %538 = vmatpush.bf16.msra.mxu0 %v376
    %539 = vmatpush.bf16.msra.mxu0 %v368
    %540 = vmatpush.bf16.msra.mxu0 %v360
    %541 = vmatpush.bf16.msra.mxu0 %v352
    %542 = vmatpush.bf16.msra.mxu0 %v344
    %543 = vmatpush.bf16.msra.mxu0 %v336
    %544 = vmatmul.bf16.gmra.mxu0 %v73
    %v545 = vpop.f32.mrf.mxu0
    %v546 = vadd.f32 0.0, %v545
    %v547 = vpop.f32.mrf.mxu0
    %548 = vdwg.mxu0
    %549 = vmatpush.bf16.msra.mxu0 %v393
    %550 = vmatpush.bf16.msra.mxu0 %v385
    %551 = vmatpush.bf16.msra.mxu0 %v377
    %552 = vmatpush.bf16.msra.mxu0 %v369
    %553 = vmatpush.bf16.msra.mxu0 %v361
    %554 = vmatpush.bf16.msra.mxu0 %v353
    %555 = vmatpush.bf16.msra.mxu0 %v345
    %556 = vmatpush.bf16.msra.mxu0 %v337
    %557 = vmatmul.bf16.gmra.mxu0 %v73
    %v558 = vpop.f32.mrf.mxu0
    %v559 = vadd.f32 0.0, %v558
    %v560 = vpop.f32.mrf.mxu0
    %561 = vdwg.mxu0
    %v562 = vld [vmem:[%s2] sm:$0xff]
    %v563 = vld [vmem:[%s2 + $0x8] sm:$0xff]
    %v564 = vrot.slane %v468, 4
    %v565 = vadd.f32 %v468, %v564
    %v566 = vrot.slane %v565, 2
    %v567 = vadd.f32 %v565, %v566
    %v568 = vrot.slane %v567, 1
    %v569 = vadd.f32 %v567, %v568
    %v570 = vrot.slane %v481, 4
    %v571 = vadd.f32 %v481, %v570
    %v572 = vrot.slane %v571, 2
    %v573 = vadd.f32 %v571, %v572
    %v574 = vrot.slane %v573, 1
    %v575 = vadd.f32 %v573, %v574
    %v576 = vrot.slane %v494, 4
    %v577 = vadd.f32 %v494, %v576
    %v578 = vrot.slane %v577, 2
    %v579 = vadd.f32 %v577, %v578
    %v580 = vrot.slane %v579, 1
    %v581 = vadd.f32 %v579, %v580
    %v582 = vrot.slane %v507, 4
    %v583 = vadd.f32 %v507, %v582
    %v584 = vrot.slane %v583, 2
    %v585 = vadd.f32 %v583, %v584
    %v586 = vrot.slane %v585, 1
    %v587 = vadd.f32 %v585, %v586
    %v588 = vrot.slane %v520, 4
    %v589 = vadd.f32 %v520, %v588
    %v590 = vrot.slane %v589, 2
    %v591 = vadd.f32 %v589, %v590
    %v592 = vrot.slane %v591, 1
    %v593 = vadd.f32 %v591, %v592
    %v594 = vrot.slane %v533, 4
    %v595 = vadd.f32 %v533, %v594
    %v596 = vrot.slane %v595, 2
    %v597 = vadd.f32 %v595, %v596
    %v598 = vrot.slane %v597, 1
    %v599 = vadd.f32 %v597, %v598
    %v600 = vrot.slane %v546, 4
    %v601 = vadd.f32 %v546, %v600
    %v602 = vrot.slane %v601, 2
    %v603 = vadd.f32 %v601, %v602
    %v604 = vrot.slane %v603, 1
    %v605 = vadd.f32 %v603, %v604
    %v606 = vrot.slane %v559, 4
    %v607 = vadd.f32 %v559, %v606
    %v608 = vrot.slane %v607, 2
    %v609 = vadd.f32 %v607, %v608
    %v610 = vrot.slane %v609, 1
    %v611 = vadd.f32 %v609, %v610
    %v612 = vrcp.pop 8.0
    %v613 = vmul.f32 8.0, %v612
    %v614 = vsub.f32 1.0, %v613
    %v615 = vmul.f32 %v612, %v614
    %v616 = vadd.f32 %v612, %v615
    %vm617 = vweird.f32 %v612
    %v618 = vsel %vm617, %v612, %v616
    %v619 = vmul.f32 %v569, %v618
    %v620 = vmul.f32 %v575, %v618
    %v621 = vmul.f32 %v581, %v618
    %v622 = vmul.f32 %v587, %v618
    %v623 = vmul.f32 %v593, %v618
    %v624 = vmul.f32 %v599, %v618
    %v625 = vmul.f32 %v605, %v618
    %v626 = vmul.f32 %v611, %v618
    %v627 = vsub.f32 %v468, %v619
    %v628 = vsub.f32 %v481, %v620
    %v629 = vsub.f32 %v494, %v621
    %v630 = vsub.f32 %v507, %v622
    %v631 = vsub.f32 %v520, %v623
    %v632 = vsub.f32 %v533, %v624
    %v633 = vsub.f32 %v546, %v625
    %v634 = vsub.f32 %v559, %v626
    %v635 = vmul.f32 %v627, %v627
    %v636 = vmul.f32 %v628, %v628
    %v637 = vmul.f32 %v629, %v629
    %v638 = vmul.f32 %v630, %v630
    %v639 = vmul.f32 %v631, %v631
    %v640 = vmul.f32 %v632, %v632
    %v641 = vmul.f32 %v633, %v633
    %v642 = vmul.f32 %v634, %v634
    %v643 = vrot.slane %v635, 4
    %v644 = vadd.f32 %v635, %v643
    %v645 = vrot.slane %v644, 2
    %v646 = vadd.f32 %v644, %v645
    %v647 = vrot.slane %v646, 1
    %v648 = vadd.f32 %v646, %v647
    %v649 = vrot.slane %v636, 4
    %v650 = vadd.f32 %v636, %v649
    %v651 = vrot.slane %v650, 2
    %v652 = vadd.f32 %v650, %v651
    %v653 = vrot.slane %v652, 1
    %v654 = vadd.f32 %v652, %v653
    %v655 = vrot.slane %v637, 4
    %v656 = vadd.f32 %v637, %v655
    %v657 = vrot.slane %v656, 2
    %v658 = vadd.f32 %v656, %v657
    %v659 = vrot.slane %v658, 1
    %v660 = vadd.f32 %v658, %v659
    %v661 = vrot.slane %v638, 4
    %v662 = vadd.f32 %v638, %v661
    %v663 = vrot.slane %v662, 2
    %v664 = vadd.f32 %v662, %v663
    %v665 = vrot.slane %v664, 1
    %v666 = vadd.f32 %v664, %v665
    %v667 = vrot.slane %v639, 4
    %v668 = vadd.f32 %v639, %v667
    %v669 = vrot.slane %v668, 2
    %v670 = vadd.f32 %v668, %v669
    %v671 = vrot.slane %v670, 1
    %v672 = vadd.f32 %v670, %v671
    %v673 = vrot.slane %v640, 4
    %v674 = vadd.f32 %v640, %v673
    %v675 = vrot.slane %v674, 2
    %v676 = vadd.f32 %v674, %v675
    %v677 = vrot.slane %v676, 1
    %v678 = vadd.f32 %v676, %v677
    %v679 = vrot.slane %v641, 4
    %v680 = vadd.f32 %v641, %v679
    %v681 = vrot.slane %v680, 2
    %v682 = vadd.f32 %v680, %v681
    %v683 = vrot.slane %v682, 1
    %v684 = vadd.f32 %v682, %v683
    %v685 = vrot.slane %v642, 4
    %v686 = vadd.f32 %v642, %v685
    %v687 = vrot.slane %v686, 2
    %v688 = vadd.f32 %v686, %v687
    %v689 = vrot.slane %v688, 1
    %v690 = vadd.f32 %v688, %v689
    %v691 = vmul.f32 %v648, %v618
    %v692 = vmul.f32 %v654, %v618
    %v693 = vmul.f32 %v660, %v618
    %v694 = vmul.f32 %v666, %v618
    %v695 = vmul.f32 %v672, %v618
    %v696 = vmul.f32 %v678, %v618
    %v697 = vmul.f32 %v684, %v618
    %v698 = vmul.f32 %v690, %v618
    %v699 = vadd.f32 %v691, 1e-05
    %v700 = vadd.f32 %v692, 1e-05
    %v701 = vadd.f32 %v693, 1e-05
    %v702 = vadd.f32 %v694, 1e-05
    %v703 = vadd.f32 %v695, 1e-05
    %v704 = vadd.f32 %v696, 1e-05
    %v705 = vadd.f32 %v697, 1e-05
    %v706 = vadd.f32 %v698, 1e-05
    %v707 = vrsqrt.pop %v699
    %v708 = vmul.f32 %v707, %v699
    %v709 = vmul.f32 %v708, %v707
    %v710 = vmul.f32 0.5, %v709
    %v711 = vsub.f32 1.5, %v710
    %v712 = vmul.f32 %v707, %v711
    %vm713 = vweird.f32 %v699
    %vm714 = vweird.f32 %v707
    %vm715 = vmor %vm713, %vm714
    %v716 = vsel %vm715, %v707, %v712
    %v717 = vrsqrt.pop %v700
    %v718 = vmul.f32 %v717, %v700
    %v719 = vmul.f32 %v718, %v717
    %v720 = vmul.f32 0.5, %v719
    %v721 = vsub.f32 1.5, %v720
    %v722 = vmul.f32 %v717, %v721
    %vm723 = vweird.f32 %v700
    %vm724 = vweird.f32 %v717
    %vm725 = vmor %vm723, %vm724
    %v726 = vsel %vm725, %v717, %v722
    %v727 = vrsqrt.pop %v701
    %v728 = vmul.f32 %v727, %v701
    %v729 = vmul.f32 %v728, %v727
    %v730 = vmul.f32 0.5, %v729
    %v731 = vsub.f32 1.5, %v730
    %v732 = vmul.f32 %v727, %v731
    %vm733 = vweird.f32 %v701
    %vm734 = vweird.f32 %v727
    %vm735 = vmor %vm733, %vm734
    %v736 = vsel %vm735, %v727, %v732
    %v737 = vrsqrt.pop %v702
    %v738 = vmul.f32 %v737, %v702
    %v739 = vmul.f32 %v738, %v737
    %v740 = vmul.f32 0.5, %v739
    %v741 = vsub.f32 1.5, %v740
    %v742 = vmul.f32 %v737, %v741
    %vm743 = vweird.f32 %v702
    %vm744 = vweird.f32 %v737
    %vm745 = vmor %vm743, %vm744
    %v746 = vsel %vm745, %v737, %v742
    %v747 = vrsqrt.pop %v703
    %v748 = vmul.f32 %v747, %v703
    %v749 = vmul.f32 %v748, %v747
    %v750 = vmul.f32 0.5, %v749
    %v751 = vsub.f32 1.5, %v750
    %v752 = vmul.f32 %v747, %v751
    %vm753 = vweird.f32 %v703
    %vm754 = vweird.f32 %v747
    %vm755 = vmor %vm753, %vm754
    %v756 = vsel %vm755, %v747, %v752
    %v757 = vrsqrt.pop %v704
    %v758 = vmul.f32 %v757, %v704
    %v759 = vmul.f32 %v758, %v757
    %v760 = vmul.f32 0.5, %v759
    %v761 = vsub.f32 1.5, %v760
    %v762 = vmul.f32 %v757, %v761
    %vm763 = vweird.f32 %v704
    %vm764 = vweird.f32 %v757
    %vm765 = vmor %vm763, %vm764
    %v766 = vsel %vm765, %v757, %v762
    %v767 = vrsqrt.pop %v705
    %v768 = vmul.f32 %v767, %v705
    %v769 = vmul.f32 %v768, %v767
    %v770 = vmul.f32 0.5, %v769
    %v771 = vsub.f32 1.5, %v770
    %v772 = vmul.f32 %v767, %v771
    %vm773 = vweird.f32 %v705
    %vm774 = vweird.f32 %v767
    %vm775 = vmor %vm773, %vm774
    %v776 = vsel %vm775, %v767, %v772
    %v777 = vrsqrt.pop %v706
    %v778 = vmul.f32 %v777, %v706
    %v779 = vmul.f32 %v778, %v777
    %v780 = vmul.f32 0.5, %v779
    %v781 = vsub.f32 1.5, %v780
    %v782 = vmul.f32 %v777, %v781
    %vm783 = vweird.f32 %v706
    %vm784 = vweird.f32 %v777
    %vm785 = vmor %vm783, %vm784
    %v786 = vsel %vm785, %v777, %v782
    %v787 = vmul.f32 %v627, %v716
    %v788 = vmul.f32 %v628, %v726
    %v789 = vmul.f32 %v629, %v736
    %v790 = vmul.f32 %v630, %v746
    %v791 = vmul.f32 %v631, %v756
    %v792 = vmul.f32 %v632, %v766
    %v793 = vmul.f32 %v633, %v776
    %v794 = vmul.f32 %v634, %v786
    %v797 = vperm.slane %v562, 0
    %v798 = vperm.slane %v562, 2
    %v799 = vperm.slane %v562, 4
    %v800 = vperm.slane %v562, 6
    %v801 = vperm.slane %v563, 0
    %v802 = vperm.slane %v563, 2
    %v803 = vperm.slane %v563, 4
    %v804 = vperm.slane %v563, 6
    %v813 = vperm.slane %v797, 0
    %v814 = vperm.slane %v798, 0
    %v815 = vperm.slane %v799, 0
    %v816 = vperm.slane %v800, 0
    %v817 = vperm.slane %v801, 0
    %v818 = vperm.slane %v802, 0
    %v819 = vperm.slane %v803, 0
    %v820 = vperm.slane %v804, 0
    %v821 = vmul.f32 %v787, %v813
    %v822 = vmul.f32 %v788, %v814
    %v823 = vmul.f32 %v789, %v815
    %v824 = vmul.f32 %v790, %v816
    %v825 = vmul.f32 %v791, %v817
    %v826 = vmul.f32 %v792, %v818
    %v827 = vmul.f32 %v793, %v819
    %v828 = vmul.f32 %v794, %v820
    %v829 = vperm.slane %v562, 1
    %v830 = vperm.slane %v562, 3
    %v831 = vperm.slane %v562, 5
    %v832 = vperm.slane %v562, 7
    %v833 = vperm.slane %v563, 1
    %v834 = vperm.slane %v563, 3
    %v835 = vperm.slane %v563, 5
    %v836 = vperm.slane %v563, 7
    %v845 = vperm.slane %v829, 1
    %v846 = vperm.slane %v830, 1
    %v847 = vperm.slane %v831, 1
    %v848 = vperm.slane %v832, 1
    %v849 = vperm.slane %v833, 1
    %v850 = vperm.slane %v834, 1
    %v851 = vperm.slane %v835, 1
    %v852 = vperm.slane %v836, 1
    %v853 = vadd.f32 %v821, %v845
    %v854 = vadd.f32 %v822, %v846
    %v855 = vadd.f32 %v823, %v847
    %v856 = vadd.f32 %v824, %v848
    %v857 = vadd.f32 %v825, %v849
    %v858 = vadd.f32 %v826, %v850
    %v859 = vadd.f32 %v827, %v851
    %v860 = vadd.f32 %v828, %v852
    %vm861 = vcmp.gt.f32.partialorder %v853, 0.0
    %vm862 = vcmp.gt.f32.partialorder %v854, 0.0
    %vm863 = vcmp.gt.f32.partialorder %v855, 0.0
    %vm864 = vcmp.gt.f32.partialorder %v856, 0.0
    %vm865 = vcmp.gt.f32.partialorder %v857, 0.0
    %vm866 = vcmp.gt.f32.partialorder %v858, 0.0
    %vm867 = vcmp.gt.f32.partialorder %v859, 0.0
    %vm868 = vcmp.gt.f32.partialorder %v860, 0.0
    %v869 = vmul.f32 %v853, 0.1
    %v870 = vmul.f32 %v854, 0.1
    %v871 = vmul.f32 %v855, 0.1
    %v872 = vmul.f32 %v856, 0.1
    %v873 = vmul.f32 %v857, 0.1
    %v874 = vmul.f32 %v858, 0.1
    %v875 = vmul.f32 %v859, 0.1
    %v876 = vmul.f32 %v860, 0.1
    %v877 = vsel %vm861, %v853, %v869
    %v878 = vsel %vm862, %v854, %v870
    %v879 = vsel %vm863, %v855, %v871
    %v880 = vsel %vm864, %v856, %v872
    %v881 = vsel %vm865, %v857, %v873
    %v882 = vsel %vm866, %v858, %v874
    %v883 = vsel %vm867, %v859, %v875
    %v884 = vsel %vm868, %v860, %v876
    %v885 = vpack.c.bf16 %v877, %v877
    %v886 = vpack.c.bf16 %v878, %v878
    %v887 = vpack.c.bf16 %v879, %v879
    %v888 = vpack.c.bf16 %v880, %v880
    %v889 = vpack.c.bf16 %v881, %v881
    %v890 = vpack.c.bf16 %v882, %v882
    %v891 = vpack.c.bf16 %v883, %v883
    %v892 = vpack.c.bf16 %v884, %v884
    %v893 = vld [vmem:[#allocation4] sm:$0xff]
    %v894 = vld [vmem:[#allocation4 + $0x8] sm:$0xff]
    %v895 = vld [vmem:[#allocation4 + $0x10] sm:$0xff]
    %v896 = vld [vmem:[#allocation4 + $0x18] sm:$0xff]
    %v897 = vld [vmem:[#allocation4 + $0x20] sm:$0xff]
    %v898 = vld [vmem:[#allocation4 + $0x28] sm:$0xff]
    %v899 = vld [vmem:[#allocation4 + $0x30] sm:$0xff]
    %v900 = vld [vmem:[#allocation4 + $0x38] sm:$0xff]
    %v901 = vld [vmem:[#allocation4 + $0x40] sm:$0xff]
    %v902 = vld [vmem:[#allocation4 + $0x48] sm:$0xff]
    %v903 = vld [vmem:[#allocation4 + $0x50] sm:$0xff]
    %v904 = vld [vmem:[#allocation4 + $0x58] sm:$0xff]
    %v905 = vld [vmem:[#allocation4 + $0x60] sm:$0xff]
    %v906 = vld [vmem:[#allocation4 + $0x68] sm:$0xff]
    %v907 = vld [vmem:[#allocation4 + $0x70] sm:$0xff]
    %v908 = vld [vmem:[#allocation4 + $0x78] sm:$0xff]
    %v909 = vld [vmem:[#allocation4 + $0x80] sm:$0xff]
    %v910 = vld [vmem:[#allocation4 + $0x88] sm:$0xff]
    %v911 = vld [vmem:[#allocation4 + $0x90] sm:$0xff]
    %v912 = vld [vmem:[#allocation4 + $0x98] sm:$0xff]
    %v913 = vld [vmem:[#allocation4 + $0xa0] sm:$0xff]
    %v914 = vld [vmem:[#allocation4 + $0xa8] sm:$0xff]
    %v915 = vld [vmem:[#allocation4 + $0xb0] sm:$0xff]
    %v916 = vld [vmem:[#allocation4 + $0xb8] sm:$0xff]
    %v917 = vld [vmem:[#allocation4 + $0xc0] sm:$0xff]
    %v918 = vld [vmem:[#allocation4 + $0xc8] sm:$0xff]
    %v919 = vld [vmem:[#allocation4 + $0xd0] sm:$0xff]
    %v920 = vld [vmem:[#allocation4 + $0xd8] sm:$0xff]
    %v921 = vld [vmem:[#allocation4 + $0xe0] sm:$0xff]
    %v922 = vld [vmem:[#allocation4 + $0xe8] sm:$0xff]
    %v923 = vld [vmem:[#allocation4 + $0xf0] sm:$0xff]
    %v924 = vld [vmem:[#allocation4 + $0xf8] sm:$0xff]
    %v925 = vld [vmem:[#allocation4 + $0x100] sm:$0xff]
    %v926 = vld [vmem:[#allocation4 + $0x108] sm:$0xff]
    %v927 = vld [vmem:[#allocation4 + $0x110] sm:$0xff]
    %v928 = vld [vmem:[#allocation4 + $0x118] sm:$0xff]
    %v929 = vld [vmem:[#allocation4 + $0x120] sm:$0xff]
    %v930 = vld [vmem:[#allocation4 + $0x128] sm:$0xff]
    %v931 = vld [vmem:[#allocation4 + $0x130] sm:$0xff]
    %v932 = vld [vmem:[#allocation4 + $0x138] sm:$0xff]
    %v933 = vld [vmem:[#allocation4 + $0x140] sm:$0xff]
    %v934 = vld [vmem:[#allocation4 + $0x148] sm:$0xff]
    %v935 = vld [vmem:[#allocation4 + $0x150] sm:$0xff]
    %v936 = vld [vmem:[#allocation4 + $0x158] sm:$0xff]
    %v937 = vld [vmem:[#allocation4 + $0x160] sm:$0xff]
    %v938 = vld [vmem:[#allocation4 + $0x168] sm:$0xff]
    %v939 = vld [vmem:[#allocation4 + $0x170] sm:$0xff]
    %v940 = vld [vmem:[#allocation4 + $0x178] sm:$0xff]
    %v941 = vld [vmem:[#allocation4 + $0x180] sm:$0xff]
    %v942 = vld [vmem:[#allocation4 + $0x188] sm:$0xff]
    %v943 = vld [vmem:[#allocation4 + $0x190] sm:$0xff]
    %v944 = vld [vmem:[#allocation4 + $0x198] sm:$0xff]
    %v945 = vld [vmem:[#allocation4 + $0x1a0] sm:$0xff]
    %v946 = vld [vmem:[#allocation4 + $0x1a8] sm:$0xff]
    %v947 = vld [vmem:[#allocation4 + $0x1b0] sm:$0xff]
    %v948 = vld [vmem:[#allocation4 + $0x1b8] sm:$0xff]
    %v949 = vld [vmem:[#allocation4 + $0x1c0] sm:$0xff]
    %v950 = vld [vmem:[#allocation4 + $0x1c8] sm:$0xff]
    %v951 = vld [vmem:[#allocation4 + $0x1d0] sm:$0xff]
    %v952 = vld [vmem:[#allocation4 + $0x1d8] sm:$0xff]
    %v953 = vld [vmem:[#allocation4 + $0x1e0] sm:$0xff]
    %v954 = vld [vmem:[#allocation4 + $0x1e8] sm:$0xff]
    %v955 = vld [vmem:[#allocation4 + $0x1f0] sm:$0xff]
    %v956 = vld [vmem:[#allocation4 + $0x1f8] sm:$0xff]
    %v957 = vld [vmem:[#allocation4 + $0x200] sm:$0xff]
    %v958 = vld [vmem:[#allocation4 + $0x208] sm:$0xff]
    %v959 = vld [vmem:[#allocation4 + $0x210] sm:$0xff]
    %v960 = vld [vmem:[#allocation4 + $0x218] sm:$0xff]
    %v961 = vld [vmem:[#allocation4 + $0x220] sm:$0xff]
    %v962 = vld [vmem:[#allocation4 + $0x228] sm:$0xff]
    %v963 = vld [vmem:[#allocation4 + $0x230] sm:$0xff]
    %v964 = vld [vmem:[#allocation4 + $0x238] sm:$0xff]
    %v965 = vld [vmem:[#allocation4 + $0x240] sm:$0xff]
    %v966 = vld [vmem:[#allocation4 + $0x248] sm:$0xff]
    %v967 = vld [vmem:[#allocation4 + $0x250] sm:$0xff]
    %v968 = vld [vmem:[#allocation4 + $0x258] sm:$0xff]
    %v969 = vld [vmem:[#allocation4 + $0x260] sm:$0xff]
    %v970 = vld [vmem:[#allocation4 + $0x268] sm:$0xff]
    %v971 = vld [vmem:[#allocation4 + $0x270] sm:$0xff]
    %v972 = vld [vmem:[#allocation4 + $0x278] sm:$0xff]
    %v973 = vld [vmem:[#allocation4 + $0x280] sm:$0xff]
    %v974 = vld [vmem:[#allocation4 + $0x288] sm:$0xff]
    %v975 = vld [vmem:[#allocation4 + $0x290] sm:$0xff]
    %v976 = vld [vmem:[#allocation4 + $0x298] sm:$0xff]
    %v977 = vld [vmem:[#allocation4 + $0x2a0] sm:$0xff]
    %v978 = vld [vmem:[#allocation4 + $0x2a8] sm:$0xff]
    %v979 = vld [vmem:[#allocation4 + $0x2b0] sm:$0xff]
    %v980 = vld [vmem:[#allocation4 + $0x2b8] sm:$0xff]
    %v981 = vld [vmem:[#allocation4 + $0x2c0] sm:$0xff]
    %v982 = vld [vmem:[#allocation4 + $0x2c8] sm:$0xff]
    %v983 = vld [vmem:[#allocation4 + $0x2d0] sm:$0xff]
    %v984 = vld [vmem:[#allocation4 + $0x2d8] sm:$0xff]
    %v985 = vld [vmem:[#allocation4 + $0x2e0] sm:$0xff]
    %v986 = vld [vmem:[#allocation4 + $0x2e8] sm:$0xff]
    %v987 = vld [vmem:[#allocation4 + $0x2f0] sm:$0xff]
    %v988 = vld [vmem:[#allocation4 + $0x2f8] sm:$0xff]
    %v989 = vld [vmem:[#allocation4 + $0x300] sm:$0xff]
    %v990 = vld [vmem:[#allocation4 + $0x308] sm:$0xff]
    %v991 = vld [vmem:[#allocation4 + $0x310] sm:$0xff]
    %v992 = vld [vmem:[#allocation4 + $0x318] sm:$0xff]
    %v993 = vld [vmem:[#allocation4 + $0x320] sm:$0xff]
    %v994 = vld [vmem:[#allocation4 + $0x328] sm:$0xff]
    %v995 = vld [vmem:[#allocation4 + $0x330] sm:$0xff]
    %v996 = vld [vmem:[#allocation4 + $0x338] sm:$0xff]
    %v997 = vld [vmem:[#allocation4 + $0x340] sm:$0xff]
    %v998 = vld [vmem:[#allocation4 + $0x348] sm:$0xff]
    %v999 = vld [vmem:[#allocation4 + $0x350] sm:$0xff]
    %v1000 = vld [vmem:[#allocation4 + $0x358] sm:$0xff]
    %v1001 = vld [vmem:[#allocation4 + $0x360] sm:$0xff]
    %v1002 = vld [vmem:[#allocation4 + $0x368] sm:$0xff]
    %v1003 = vld [vmem:[#allocation4 + $0x370] sm:$0xff]
    %v1004 = vld [vmem:[#allocation4 + $0x378] sm:$0xff]
    %v1005 = vld [vmem:[#allocation4 + $0x380] sm:$0xff]
    %v1006 = vld [vmem:[#allocation4 + $0x388] sm:$0xff]
    %v1007 = vld [vmem:[#allocation4 + $0x390] sm:$0xff]
    %v1008 = vld [vmem:[#allocation4 + $0x398] sm:$0xff]
    %v1009 = vld [vmem:[#allocation4 + $0x3a0] sm:$0xff]
    %v1010 = vld [vmem:[#allocation4 + $0x3a8] sm:$0xff]
    %v1011 = vld [vmem:[#allocation4 + $0x3b0] sm:$0xff]
    %v1012 = vld [vmem:[#allocation4 + $0x3b8] sm:$0xff]
    %v1013 = vld [vmem:[#allocation4 + $0x3c0] sm:$0xff]
    %v1014 = vld [vmem:[#allocation4 + $0x3c8] sm:$0xff]
    %v1015 = vld [vmem:[#allocation4 + $0x3d0] sm:$0xff]
    %v1016 = vld [vmem:[#allocation4 + $0x3d8] sm:$0xff]
    %v1017 = vld [vmem:[#allocation4 + $0x3e0] sm:$0xff]
    %v1018 = vld [vmem:[#allocation4 + $0x3e8] sm:$0xff]
    %v1019 = vld [vmem:[#allocation4 + $0x3f0] sm:$0xff]
    %v1020 = vld [vmem:[#allocation4 + $0x3f8] sm:$0xff]
    %v1021 = vld [vmem:[#allocation4 + $0x400] sm:$0xff]
    %v1022 = vld [vmem:[#allocation4 + $0x408] sm:$0xff]
    %v1023 = vld [vmem:[#allocation4 + $0x410] sm:$0xff]
    %v1024 = vld [vmem:[#allocation4 + $0x418] sm:$0xff]
    %v1025 = vld [vmem:[#allocation4 + $0x420] sm:$0xff]
    %v1026 = vld [vmem:[#allocation4 + $0x428] sm:$0xff]
    %v1027 = vld [vmem:[#allocation4 + $0x430] sm:$0xff]
    %v1028 = vld [vmem:[#allocation4 + $0x438] sm:$0xff]
    %v1029 = vld [vmem:[#allocation4 + $0x440] sm:$0xff]
    %v1030 = vld [vmem:[#allocation4 + $0x448] sm:$0xff]
    %v1031 = vld [vmem:[#allocation4 + $0x450] sm:$0xff]
    %v1032 = vld [vmem:[#allocation4 + $0x458] sm:$0xff]
    %v1033 = vld [vmem:[#allocation4 + $0x460] sm:$0xff]
    %v1034 = vld [vmem:[#allocation4 + $0x468] sm:$0xff]
    %v1035 = vld [vmem:[#allocation4 + $0x470] sm:$0xff]
    %v1036 = vld [vmem:[#allocation4 + $0x478] sm:$0xff]
    %v1037 = vld [vmem:[#allocation4 + $0x480] sm:$0xff]
    %v1038 = vld [vmem:[#allocation4 + $0x488] sm:$0xff]
    %v1039 = vld [vmem:[#allocation4 + $0x490] sm:$0xff]
    %v1040 = vld [vmem:[#allocation4 + $0x498] sm:$0xff]
    %v1041 = vld [vmem:[#allocation4 + $0x4a0] sm:$0xff]
    %v1042 = vld [vmem:[#allocation4 + $0x4a8] sm:$0xff]
    %v1043 = vld [vmem:[#allocation4 + $0x4b0] sm:$0xff]
    %v1044 = vld [vmem:[#allocation4 + $0x4b8] sm:$0xff]
    %v1045 = vld [vmem:[#allocation4 + $0x4c0] sm:$0xff]
    %v1046 = vld [vmem:[#allocation4 + $0x4c8] sm:$0xff]
    %v1047 = vld [vmem:[#allocation4 + $0x4d0] sm:$0xff]
    %v1048 = vld [vmem:[#allocation4 + $0x4d8] sm:$0xff]
    %v1049 = vld [vmem:[#allocation4 + $0x4e0] sm:$0xff]
    %v1050 = vld [vmem:[#allocation4 + $0x4e8] sm:$0xff]
    %v1051 = vld [vmem:[#allocation4 + $0x4f0] sm:$0xff]
    %v1052 = vld [vmem:[#allocation4 + $0x4f8] sm:$0xff]
    %v1053 = vld [vmem:[#allocation4 + $0x500] sm:$0xff]
    %v1054 = vld [vmem:[#allocation4 + $0x508] sm:$0xff]
    %v1055 = vld [vmem:[#allocation4 + $0x510] sm:$0xff]
    %v1056 = vld [vmem:[#allocation4 + $0x518] sm:$0xff]
    %v1057 = vld [vmem:[#allocation4 + $0x520] sm:$0xff]
    %v1058 = vld [vmem:[#allocation4 + $0x528] sm:$0xff]
    %v1059 = vld [vmem:[#allocation4 + $0x530] sm:$0xff]
    %v1060 = vld [vmem:[#allocation4 + $0x538] sm:$0xff]
    %v1061 = vld [vmem:[#allocation4 + $0x540] sm:$0xff]
    %v1062 = vld [vmem:[#allocation4 + $0x548] sm:$0xff]
    %v1063 = vld [vmem:[#allocation4 + $0x550] sm:$0xff]
    %v1064 = vld [vmem:[#allocation4 + $0x558] sm:$0xff]
    %v1065 = vld [vmem:[#allocation4 + $0x560] sm:$0xff]
    %v1066 = vld [vmem:[#allocation4 + $0x568] sm:$0xff]
    %v1067 = vld [vmem:[#allocation4 + $0x570] sm:$0xff]
    %v1068 = vld [vmem:[#allocation4 + $0x578] sm:$0xff]
    %v1069 = vld [vmem:[#allocation4 + $0x580] sm:$0xff]
    %v1070 = vld [vmem:[#allocation4 + $0x588] sm:$0xff]
    %v1071 = vld [vmem:[#allocation4 + $0x590] sm:$0xff]
    %v1072 = vld [vmem:[#allocation4 + $0x598] sm:$0xff]
    %v1073 = vld [vmem:[#allocation4 + $0x5a0] sm:$0xff]
    %v1074 = vld [vmem:[#allocation4 + $0x5a8] sm:$0xff]
    %v1075 = vld [vmem:[#allocation4 + $0x5b0] sm:$0xff]
    %v1076 = vld [vmem:[#allocation4 + $0x5b8] sm:$0xff]
    %v1077 = vld [vmem:[#allocation4 + $0x5c0] sm:$0xff]
    %v1078 = vld [vmem:[#allocation4 + $0x5c8] sm:$0xff]
    %v1079 = vld [vmem:[#allocation4 + $0x5d0] sm:$0xff]
    %v1080 = vld [vmem:[#allocation4 + $0x5d8] sm:$0xff]
    %v1081 = vld [vmem:[#allocation4 + $0x5e0] sm:$0xff]
    %v1082 = vld [vmem:[#allocation4 + $0x5e8] sm:$0xff]
    %v1083 = vld [vmem:[#allocation4 + $0x5f0] sm:$0xff]
    %v1084 = vld [vmem:[#allocation4 + $0x5f8] sm:$0xff]
    %v1085 = vld [vmem:[#allocation4 + $0x600] sm:$0xff]
    %v1086 = vld [vmem:[#allocation4 + $0x608] sm:$0xff]
    %v1087 = vld [vmem:[#allocation4 + $0x610] sm:$0xff]
    %v1088 = vld [vmem:[#allocation4 + $0x618] sm:$0xff]
    %v1089 = vld [vmem:[#allocation4 + $0x620] sm:$0xff]
    %v1090 = vld [vmem:[#allocation4 + $0x628] sm:$0xff]
    %v1091 = vld [vmem:[#allocation4 + $0x630] sm:$0xff]
    %v1092 = vld [vmem:[#allocation4 + $0x638] sm:$0xff]
    %v1093 = vld [vmem:[#allocation4 + $0x640] sm:$0xff]
    %v1094 = vld [vmem:[#allocation4 + $0x648] sm:$0xff]
    %v1095 = vld [vmem:[#allocation4 + $0x650] sm:$0xff]
    %v1096 = vld [vmem:[#allocation4 + $0x658] sm:$0xff]
    %v1097 = vld [vmem:[#allocation4 + $0x660] sm:$0xff]
    %v1098 = vld [vmem:[#allocation4 + $0x668] sm:$0xff]
    %v1099 = vld [vmem:[#allocation4 + $0x670] sm:$0xff]
    %v1100 = vld [vmem:[#allocation4 + $0x678] sm:$0xff]
    %v1101 = vld [vmem:[#allocation4 + $0x680] sm:$0xff]
    %v1102 = vld [vmem:[#allocation4 + $0x688] sm:$0xff]
    %v1103 = vld [vmem:[#allocation4 + $0x690] sm:$0xff]
    %v1104 = vld [vmem:[#allocation4 + $0x698] sm:$0xff]
    %v1105 = vld [vmem:[#allocation4 + $0x6a0] sm:$0xff]
    %v1106 = vld [vmem:[#allocation4 + $0x6a8] sm:$0xff]
    %v1107 = vld [vmem:[#allocation4 + $0x6b0] sm:$0xff]
    %v1108 = vld [vmem:[#allocation4 + $0x6b8] sm:$0xff]
    %v1109 = vld [vmem:[#allocation4 + $0x6c0] sm:$0xff]
    %v1110 = vld [vmem:[#allocation4 + $0x6c8] sm:$0xff]
    %v1111 = vld [vmem:[#allocation4 + $0x6d0] sm:$0xff]
    %v1112 = vld [vmem:[#allocation4 + $0x6d8] sm:$0xff]
    %v1113 = vld [vmem:[#allocation4 + $0x6e0] sm:$0xff]
    %v1114 = vld [vmem:[#allocation4 + $0x6e8] sm:$0xff]
    %v1115 = vld [vmem:[#allocation4 + $0x6f0] sm:$0xff]
    %v1116 = vld [vmem:[#allocation4 + $0x6f8] sm:$0xff]
    %v1117 = vld [vmem:[#allocation4 + $0x700] sm:$0xff]
    %v1118 = vld [vmem:[#allocation4 + $0x708] sm:$0xff]
    %v1119 = vld [vmem:[#allocation4 + $0x710] sm:$0xff]
    %v1120 = vld [vmem:[#allocation4 + $0x718] sm:$0xff]
    %v1121 = vld [vmem:[#allocation4 + $0x720] sm:$0xff]
    %v1122 = vld [vmem:[#allocation4 + $0x728] sm:$0xff]
    %v1123 = vld [vmem:[#allocation4 + $0x730] sm:$0xff]
    %v1124 = vld [vmem:[#allocation4 + $0x738] sm:$0xff]
    %v1125 = vld [vmem:[#allocation4 + $0x740] sm:$0xff]
    %v1126 = vld [vmem:[#allocation4 + $0x748] sm:$0xff]
    %v1127 = vld [vmem:[#allocation4 + $0x750] sm:$0xff]
    %v1128 = vld [vmem:[#allocation4 + $0x758] sm:$0xff]
    %v1129 = vld [vmem:[#allocation4 + $0x760] sm:$0xff]
    %v1130 = vld [vmem:[#allocation4 + $0x768] sm:$0xff]
    %v1131 = vld [vmem:[#allocation4 + $0x770] sm:$0xff]
    %v1132 = vld [vmem:[#allocation4 + $0x778] sm:$0xff]
    %v1133 = vld [vmem:[#allocation4 + $0x780] sm:$0xff]
    %v1134 = vld [vmem:[#allocation4 + $0x788] sm:$0xff]
    %v1135 = vld [vmem:[#allocation4 + $0x790] sm:$0xff]
    %v1136 = vld [vmem:[#allocation4 + $0x798] sm:$0xff]
    %v1137 = vld [vmem:[#allocation4 + $0x7a0] sm:$0xff]
    %v1138 = vld [vmem:[#allocation4 + $0x7a8] sm:$0xff]
    %v1139 = vld [vmem:[#allocation4 + $0x7b0] sm:$0xff]
    %v1140 = vld [vmem:[#allocation4 + $0x7b8] sm:$0xff]
    %v1141 = vld [vmem:[#allocation4 + $0x7c0] sm:$0xff]
    %v1142 = vld [vmem:[#allocation4 + $0x7c8] sm:$0xff]
    %v1143 = vld [vmem:[#allocation4 + $0x7d0] sm:$0xff]
    %v1144 = vld [vmem:[#allocation4 + $0x7d8] sm:$0xff]
    %v1145 = vld [vmem:[#allocation4 + $0x7e0] sm:$0xff]
    %v1146 = vld [vmem:[#allocation4 + $0x7e8] sm:$0xff]
    %v1147 = vld [vmem:[#allocation4 + $0x7f0] sm:$0xff]
    %v1148 = vld [vmem:[#allocation4 + $0x7f8] sm:$0xff]
    %v1405 = vunpack.c.l.b16 %v893
    %v1406 = vunpack.c.h.b16 %v893
    %v1407 = vunpack.c.l.b16 %v894
    %v1408 = vunpack.c.h.b16 %v894
    %v1409 = vunpack.c.l.b16 %v895
    %v1410 = vunpack.c.h.b16 %v895
    %v1411 = vunpack.c.l.b16 %v896
    %v1412 = vunpack.c.h.b16 %v896
    %v1413 = vunpack.c.l.b16 %v897
    %v1414 = vunpack.c.h.b16 %v897
    %v1415 = vunpack.c.l.b16 %v898
    %v1416 = vunpack.c.h.b16 %v898
    %v1417 = vunpack.c.l.b16 %v899
    %v1418 = vunpack.c.h.b16 %v899
    %v1419 = vunpack.c.l.b16 %v900
    %v1420 = vunpack.c.h.b16 %v900
    %v1421 = vunpack.c.l.b16 %v901
    %v1422 = vunpack.c.h.b16 %v901
    %v1423 = vunpack.c.l.b16 %v902
    %v1424 = vunpack.c.h.b16 %v902
    %v1425 = vunpack.c.l.b16 %v903
    %v1426 = vunpack.c.h.b16 %v903
    %v1427 = vunpack.c.l.b16 %v904
    %v1428 = vunpack.c.h.b16 %v904
    %v1429 = vunpack.c.l.b16 %v905
    %v1430 = vunpack.c.h.b16 %v905
    %v1431 = vunpack.c.l.b16 %v906
    %v1432 = vunpack.c.h.b16 %v906
    %v1433 = vunpack.c.l.b16 %v907
    %v1434 = vunpack.c.h.b16 %v907
    %v1435 = vunpack.c.l.b16 %v908
    %v1436 = vunpack.c.h.b16 %v908
    %v1437 = vunpack.c.l.b16 %v909
    %v1438 = vunpack.c.h.b16 %v909
    %v1439 = vunpack.c.l.b16 %v910
    %v1440 = vunpack.c.h.b16 %v910
    %v1441 = vunpack.c.l.b16 %v911
    %v1442 = vunpack.c.h.b16 %v911
    %v1443 = vunpack.c.l.b16 %v912
    %v1444 = vunpack.c.h.b16 %v912
    %v1445 = vunpack.c.l.b16 %v913
    %v1446 = vunpack.c.h.b16 %v913
    %v1447 = vunpack.c.l.b16 %v914
    %v1448 = vunpack.c.h.b16 %v914
    %v1449 = vunpack.c.l.b16 %v915
    %v1450 = vunpack.c.h.b16 %v915
    %v1451 = vunpack.c.l.b16 %v916
    %v1452 = vunpack.c.h.b16 %v916
    %v1453 = vunpack.c.l.b16 %v917
    %v1454 = vunpack.c.h.b16 %v917
    %v1455 = vunpack.c.l.b16 %v918
    %v1456 = vunpack.c.h.b16 %v918
    %v1457 = vunpack.c.l.b16 %v919
    %v1458 = vunpack.c.h.b16 %v919
    %v1459 = vunpack.c.l.b16 %v920
    %v1460 = vunpack.c.h.b16 %v920
    %v1461 = vunpack.c.l.b16 %v921
    %v1462 = vunpack.c.h.b16 %v921
    %v1463 = vunpack.c.l.b16 %v922
    %v1464 = vunpack.c.h.b16 %v922
    %v1465 = vunpack.c.l.b16 %v923
    %v1466 = vunpack.c.h.b16 %v923
    %v1467 = vunpack.c.l.b16 %v924
    %v1468 = vunpack.c.h.b16 %v924
    %v1469 = vunpack.c.l.b16 %v925
    %v1470 = vunpack.c.h.b16 %v925
    %v1471 = vunpack.c.l.b16 %v926
    %v1472 = vunpack.c.h.b16 %v926
    %v1473 = vunpack.c.l.b16 %v927
    %v1474 = vunpack.c.h.b16 %v927
    %v1475 = vunpack.c.l.b16 %v928
    %v1476 = vunpack.c.h.b16 %v928
    %v1477 = vunpack.c.l.b16 %v929
    %v1478 = vunpack.c.h.b16 %v929
    %v1479 = vunpack.c.l.b16 %v930
    %v1480 = vunpack.c.h.b16 %v930
    %v1481 = vunpack.c.l.b16 %v931
    %v1482 = vunpack.c.h.b16 %v931
    %v1483 = vunpack.c.l.b16 %v932
    %v1484 = vunpack.c.h.b16 %v932
    %v1485 = vunpack.c.l.b16 %v933
    %v1486 = vunpack.c.h.b16 %v933
    %v1487 = vunpack.c.l.b16 %v934
    %v1488 = vunpack.c.h.b16 %v934
    %v1489 = vunpack.c.l.b16 %v935
    %v1490 = vunpack.c.h.b16 %v935
    %v1491 = vunpack.c.l.b16 %v936
    %v1492 = vunpack.c.h.b16 %v936
    %v1493 = vunpack.c.l.b16 %v937
    %v1494 = vunpack.c.h.b16 %v937
    %v1495 = vunpack.c.l.b16 %v938
    %v1496 = vunpack.c.h.b16 %v938
    %v1497 = vunpack.c.l.b16 %v939
    %v1498 = vunpack.c.h.b16 %v939
    %v1499 = vunpack.c.l.b16 %v940
    %v1500 = vunpack.c.h.b16 %v940
    %v1501 = vunpack.c.l.b16 %v941
    %v1502 = vunpack.c.h.b16 %v941
    %v1503 = vunpack.c.l.b16 %v942
    %v1504 = vunpack.c.h.b16 %v942
    %v1505 = vunpack.c.l.b16 %v943
    %v1506 = vunpack.c.h.b16 %v943
    %v1507 = vunpack.c.l.b16 %v944
    %v1508 = vunpack.c.h.b16 %v944
    %v1509 = vunpack.c.l.b16 %v945
    %v1510 = vunpack.c.h.b16 %v945
    %v1511 = vunpack.c.l.b16 %v946
    %v1512 = vunpack.c.h.b16 %v946
    %v1513 = vunpack.c.l.b16 %v947
    %v1514 = vunpack.c.h.b16 %v947
    %v1515 = vunpack.c.l.b16 %v948
    %v1516 = vunpack.c.h.b16 %v948
    %v1517 = vunpack.c.l.b16 %v949
    %v1518 = vunpack.c.h.b16 %v949
    %v1519 = vunpack.c.l.b16 %v950
    %v1520 = vunpack.c.h.b16 %v950
    %v1521 = vunpack.c.l.b16 %v951
    %v1522 = vunpack.c.h.b16 %v951
    %v1523 = vunpack.c.l.b16 %v952
    %v1524 = vunpack.c.h.b16 %v952
    %v1525 = vunpack.c.l.b16 %v953
    %v1526 = vunpack.c.h.b16 %v953
    %v1527 = vunpack.c.l.b16 %v954
    %v1528 = vunpack.c.h.b16 %v954
    %v1529 = vunpack.c.l.b16 %v955
    %v1530 = vunpack.c.h.b16 %v955
    %v1531 = vunpack.c.l.b16 %v956
    %v1532 = vunpack.c.h.b16 %v956
    %v1533 = vunpack.c.l.b16 %v957
    %v1534 = vunpack.c.h.b16 %v957
    %v1535 = vunpack.c.l.b16 %v958
    %v1536 = vunpack.c.h.b16 %v958
    %v1537 = vunpack.c.l.b16 %v959
    %v1538 = vunpack.c.h.b16 %v959
    %v1539 = vunpack.c.l.b16 %v960
    %v1540 = vunpack.c.h.b16 %v960
    %v1541 = vunpack.c.l.b16 %v961
    %v1542 = vunpack.c.h.b16 %v961
    %v1543 = vunpack.c.l.b16 %v962
    %v1544 = vunpack.c.h.b16 %v962
    %v1545 = vunpack.c.l.b16 %v963
    %v1546 = vunpack.c.h.b16 %v963
    %v1547 = vunpack.c.l.b16 %v964
    %v1548 = vunpack.c.h.b16 %v964
    %v1549 = vunpack.c.l.b16 %v965
    %v1550 = vunpack.c.h.b16 %v965
    %v1551 = vunpack.c.l.b16 %v966
    %v1552 = vunpack.c.h.b16 %v966
    %v1553 = vunpack.c.l.b16 %v967
    %v1554 = vunpack.c.h.b16 %v967
    %v1555 = vunpack.c.l.b16 %v968
    %v1556 = vunpack.c.h.b16 %v968
    %v1557 = vunpack.c.l.b16 %v969
    %v1558 = vunpack.c.h.b16 %v969
    %v1559 = vunpack.c.l.b16 %v970
    %v1560 = vunpack.c.h.b16 %v970
    %v1561 = vunpack.c.l.b16 %v971
    %v1562 = vunpack.c.h.b16 %v971
    %v1563 = vunpack.c.l.b16 %v972
    %v1564 = vunpack.c.h.b16 %v972
    %v1565 = vunpack.c.l.b16 %v973
    %v1566 = vunpack.c.h.b16 %v973
    %v1567 = vunpack.c.l.b16 %v974
    %v1568 = vunpack.c.h.b16 %v974
    %v1569 = vunpack.c.l.b16 %v975
    %v1570 = vunpack.c.h.b16 %v975
    %v1571 = vunpack.c.l.b16 %v976
    %v1572 = vunpack.c.h.b16 %v976
    %v1573 = vunpack.c.l.b16 %v977
    %v1574 = vunpack.c.h.b16 %v977
    %v1575 = vunpack.c.l.b16 %v978
    %v1576 = vunpack.c.h.b16 %v978
    %v1577 = vunpack.c.l.b16 %v979
    %v1578 = vunpack.c.h.b16 %v979
    %v1579 = vunpack.c.l.b16 %v980
    %v1580 = vunpack.c.h.b16 %v980
    %v1581 = vunpack.c.l.b16 %v981
    %v1582 = vunpack.c.h.b16 %v981
    %v1583 = vunpack.c.l.b16 %v982
    %v1584 = vunpack.c.h.b16 %v982
    %v1585 = vunpack.c.l.b16 %v983
    %v1586 = vunpack.c.h.b16 %v983
    %v1587 = vunpack.c.l.b16 %v984
    %v1588 = vunpack.c.h.b16 %v984
    %v1589 = vunpack.c.l.b16 %v985
    %v1590 = vunpack.c.h.b16 %v985
    %v1591 = vunpack.c.l.b16 %v986
    %v1592 = vunpack.c.h.b16 %v986
    %v1593 = vunpack.c.l.b16 %v987
    %v1594 = vunpack.c.h.b16 %v987
    %v1595 = vunpack.c.l.b16 %v988
    %v1596 = vunpack.c.h.b16 %v988
    %v1597 = vunpack.c.l.b16 %v989
    %v1598 = vunpack.c.h.b16 %v989
    %v1599 = vunpack.c.l.b16 %v990
    %v1600 = vunpack.c.h.b16 %v990
    %v1601 = vunpack.c.l.b16 %v991
    %v1602 = vunpack.c.h.b16 %v991
    %v1603 = vunpack.c.l.b16 %v992
    %v1604 = vunpack.c.h.b16 %v992
    %v1605 = vunpack.c.l.b16 %v993
    %v1606 = vunpack.c.h.b16 %v993
    %v1607 = vunpack.c.l.b16 %v994
    %v1608 = vunpack.c.h.b16 %v994
    %v1609 = vunpack.c.l.b16 %v995
    %v1610 = vunpack.c.h.b16 %v995
    %v1611 = vunpack.c.l.b16 %v996
    %v1612 = vunpack.c.h.b16 %v996
    %v1613 = vunpack.c.l.b16 %v997
    %v1614 = vunpack.c.h.b16 %v997
    %v1615 = vunpack.c.l.b16 %v998
    %v1616 = vunpack.c.h.b16 %v998
    %v1617 = vunpack.c.l.b16 %v999
    %v1618 = vunpack.c.h.b16 %v999
    %v1619 = vunpack.c.l.b16 %v1000
    %v1620 = vunpack.c.h.b16 %v1000
    %v1621 = vunpack.c.l.b16 %v1001
    %v1622 = vunpack.c.h.b16 %v1001
    %v1623 = vunpack.c.l.b16 %v1002
    %v1624 = vunpack.c.h.b16 %v1002
    %v1625 = vunpack.c.l.b16 %v1003
    %v1626 = vunpack.c.h.b16 %v1003
    %v1627 = vunpack.c.l.b16 %v1004
    %v1628 = vunpack.c.h.b16 %v1004
    %v1629 = vunpack.c.l.b16 %v1005
    %v1630 = vunpack.c.h.b16 %v1005
    %v1631 = vunpack.c.l.b16 %v1006
    %v1632 = vunpack.c.h.b16 %v1006
    %v1633 = vunpack.c.l.b16 %v1007
    %v1634 = vunpack.c.h.b16 %v1007
    %v1635 = vunpack.c.l.b16 %v1008
    %v1636 = vunpack.c.h.b16 %v1008
    %v1637 = vunpack.c.l.b16 %v1009
    %v1638 = vunpack.c.h.b16 %v1009
    %v1639 = vunpack.c.l.b16 %v1010
    %v1640 = vunpack.c.h.b16 %v1010
    %v1641 = vunpack.c.l.b16 %v1011
    %v1642 = vunpack.c.h.b16 %v1011
    %v1643 = vunpack.c.l.b16 %v1012
    %v1644 = vunpack.c.h.b16 %v1012
    %v1645 = vunpack.c.l.b16 %v1013
    %v1646 = vunpack.c.h.b16 %v1013
    %v1647 = vunpack.c.l.b16 %v1014
    %v1648 = vunpack.c.h.b16 %v1014
    %v1649 = vunpack.c.l.b16 %v1015
    %v1650 = vunpack.c.h.b16 %v1015
    %v1651 = vunpack.c.l.b16 %v1016
    %v1652 = vunpack.c.h.b16 %v1016
    %v1653 = vunpack.c.l.b16 %v1017
    %v1654 = vunpack.c.h.b16 %v1017
    %v1655 = vunpack.c.l.b16 %v1018
    %v1656 = vunpack.c.h.b16 %v1018
    %v1657 = vunpack.c.l.b16 %v1019
    %v1658 = vunpack.c.h.b16 %v1019
    %v1659 = vunpack.c.l.b16 %v1020
    %v1660 = vunpack.c.h.b16 %v1020
    %v1661 = vunpack.c.l.b16 %v1021
    %v1662 = vunpack.c.h.b16 %v1021
    %v1663 = vunpack.c.l.b16 %v1022
    %v1664 = vunpack.c.h.b16 %v1022
    %v1665 = vunpack.c.l.b16 %v1023
    %v1666 = vunpack.c.h.b16 %v1023
    %v1667 = vunpack.c.l.b16 %v1024
    %v1668 = vunpack.c.h.b16 %v1024
    %v1669 = vunpack.c.l.b16 %v1025
    %v1670 = vunpack.c.h.b16 %v1025
    %v1671 = vunpack.c.l.b16 %v1026
    %v1672 = vunpack.c.h.b16 %v1026
    %v1673 = vunpack.c.l.b16 %v1027
    %v1674 = vunpack.c.h.b16 %v1027
    %v1675 = vunpack.c.l.b16 %v1028
    %v1676 = vunpack.c.h.b16 %v1028
    %v1677 = vunpack.c.l.b16 %v1029
    %v1678 = vunpack.c.h.b16 %v1029
    %v1679 = vunpack.c.l.b16 %v1030
    %v1680 = vunpack.c.h.b16 %v1030
    %v1681 = vunpack.c.l.b16 %v1031
    %v1682 = vunpack.c.h.b16 %v1031
    %v1683 = vunpack.c.l.b16 %v1032
    %v1684 = vunpack.c.h.b16 %v1032
    %v1685 = vunpack.c.l.b16 %v1033
    %v1686 = vunpack.c.h.b16 %v1033
    %v1687 = vunpack.c.l.b16 %v1034
    %v1688 = vunpack.c.h.b16 %v1034
    %v1689 = vunpack.c.l.b16 %v1035
    %v1690 = vunpack.c.h.b16 %v1035
    %v1691 = vunpack.c.l.b16 %v1036
    %v1692 = vunpack.c.h.b16 %v1036
    %v1693 = vunpack.c.l.b16 %v1037
    %v1694 = vunpack.c.h.b16 %v1037
    %v1695 = vunpack.c.l.b16 %v1038
    %v1696 = vunpack.c.h.b16 %v1038
    %v1697 = vunpack.c.l.b16 %v1039
    %v1698 = vunpack.c.h.b16 %v1039
    %v1699 = vunpack.c.l.b16 %v1040
    %v1700 = vunpack.c.h.b16 %v1040
    %v1701 = vunpack.c.l.b16 %v1041
    %v1702 = vunpack.c.h.b16 %v1041
    %v1703 = vunpack.c.l.b16 %v1042
    %v1704 = vunpack.c.h.b16 %v1042
    %v1705 = vunpack.c.l.b16 %v1043
    %v1706 = vunpack.c.h.b16 %v1043
    %v1707 = vunpack.c.l.b16 %v1044
    %v1708 = vunpack.c.h.b16 %v1044
    %v1709 = vunpack.c.l.b16 %v1045
    %v1710 = vunpack.c.h.b16 %v1045
    %v1711 = vunpack.c.l.b16 %v1046
    %v1712 = vunpack.c.h.b16 %v1046
    %v1713 = vunpack.c.l.b16 %v1047
    %v1714 = vunpack.c.h.b16 %v1047
    %v1715 = vunpack.c.l.b16 %v1048
    %v1716 = vunpack.c.h.b16 %v1048
    %v1717 = vunpack.c.l.b16 %v1049
    %v1718 = vunpack.c.h.b16 %v1049
    %v1719 = vunpack.c.l.b16 %v1050
    %v1720 = vunpack.c.h.b16 %v1050
    %v1721 = vunpack.c.l.b16 %v1051
    %v1722 = vunpack.c.h.b16 %v1051
    %v1723 = vunpack.c.l.b16 %v1052
    %v1724 = vunpack.c.h.b16 %v1052
    %v1725 = vunpack.c.l.b16 %v1053
    %v1726 = vunpack.c.h.b16 %v1053
    %v1727 = vunpack.c.l.b16 %v1054
    %v1728 = vunpack.c.h.b16 %v1054
    %v1729 = vunpack.c.l.b16 %v1055
    %v1730 = vunpack.c.h.b16 %v1055
    %v1731 = vunpack.c.l.b16 %v1056
    %v1732 = vunpack.c.h.b16 %v1056
    %v1733 = vunpack.c.l.b16 %v1057
    %v1734 = vunpack.c.h.b16 %v1057
    %v1735 = vunpack.c.l.b16 %v1058
    %v1736 = vunpack.c.h.b16 %v1058
    %v1737 = vunpack.c.l.b16 %v1059
    %v1738 = vunpack.c.h.b16 %v1059
    %v1739 = vunpack.c.l.b16 %v1060
    %v1740 = vunpack.c.h.b16 %v1060
    %v1741 = vunpack.c.l.b16 %v1061
    %v1742 = vunpack.c.h.b16 %v1061
    %v1743 = vunpack.c.l.b16 %v1062
    %v1744 = vunpack.c.h.b16 %v1062
    %v1745 = vunpack.c.l.b16 %v1063
    %v1746 = vunpack.c.h.b16 %v1063
    %v1747 = vunpack.c.l.b16 %v1064
    %v1748 = vunpack.c.h.b16 %v1064
    %v1749 = vunpack.c.l.b16 %v1065
    %v1750 = vunpack.c.h.b16 %v1065
    %v1751 = vunpack.c.l.b16 %v1066
    %v1752 = vunpack.c.h.b16 %v1066
    %v1753 = vunpack.c.l.b16 %v1067
    %v1754 = vunpack.c.h.b16 %v1067
    %v1755 = vunpack.c.l.b16 %v1068
    %v1756 = vunpack.c.h.b16 %v1068
    %v1757 = vunpack.c.l.b16 %v1069
    %v1758 = vunpack.c.h.b16 %v1069
    %v1759 = vunpack.c.l.b16 %v1070
    %v1760 = vunpack.c.h.b16 %v1070
    %v1761 = vunpack.c.l.b16 %v1071
    %v1762 = vunpack.c.h.b16 %v1071
    %v1763 = vunpack.c.l.b16 %v1072
    %v1764 = vunpack.c.h.b16 %v1072
    %v1765 = vunpack.c.l.b16 %v1073
    %v1766 = vunpack.c.h.b16 %v1073
    %v1767 = vunpack.c.l.b16 %v1074
    %v1768 = vunpack.c.h.b16 %v1074
    %v1769 = vunpack.c.l.b16 %v1075
    %v1770 = vunpack.c.h.b16 %v1075
    %v1771 = vunpack.c.l.b16 %v1076
    %v1772 = vunpack.c.h.b16 %v1076
    %v1773 = vunpack.c.l.b16 %v1077
    %v1774 = vunpack.c.h.b16 %v1077
    %v1775 = vunpack.c.l.b16 %v1078
    %v1776 = vunpack.c.h.b16 %v1078
    %v1777 = vunpack.c.l.b16 %v1079
    %v1778 = vunpack.c.h.b16 %v1079
    %v1779 = vunpack.c.l.b16 %v1080
    %v1780 = vunpack.c.h.b16 %v1080
    %v1781 = vunpack.c.l.b16 %v1081
    %v1782 = vunpack.c.h.b16 %v1081
    %v1783 = vunpack.c.l.b16 %v1082
    %v1784 = vunpack.c.h.b16 %v1082
    %v1785 = vunpack.c.l.b16 %v1083
    %v1786 = vunpack.c.h.b16 %v1083
    %v1787 = vunpack.c.l.b16 %v1084
    %v1788 = vunpack.c.h.b16 %v1084
    %v1789 = vunpack.c.l.b16 %v1085
    %v1790 = vunpack.c.h.b16 %v1085
    %v1791 = vunpack.c.l.b16 %v1086
    %v1792 = vunpack.c.h.b16 %v1086
    %v1793 = vunpack.c.l.b16 %v1087
    %v1794 = vunpack.c.h.b16 %v1087
    %v1795 = vunpack.c.l.b16 %v1088
    %v1796 = vunpack.c.h.b16 %v1088
    %v1797 = vunpack.c.l.b16 %v1089
    %v1798 = vunpack.c.h.b16 %v1089
    %v1799 = vunpack.c.l.b16 %v1090
    %v1800 = vunpack.c.h.b16 %v1090
    %v1801 = vunpack.c.l.b16 %v1091
    %v1802 = vunpack.c.h.b16 %v1091
    %v1803 = vunpack.c.l.b16 %v1092
    %v1804 = vunpack.c.h.b16 %v1092
    %v1805 = vunpack.c.l.b16 %v1093
    %v1806 = vunpack.c.h.b16 %v1093
    %v1807 = vunpack.c.l.b16 %v1094
    %v1808 = vunpack.c.h.b16 %v1094
    %v1809 = vunpack.c.l.b16 %v1095
    %v1810 = vunpack.c.h.b16 %v1095
    %v1811 = vunpack.c.l.b16 %v1096
    %v1812 = vunpack.c.h.b16 %v1096
    %v1813 = vunpack.c.l.b16 %v1097
    %v1814 = vunpack.c.h.b16 %v1097
    %v1815 = vunpack.c.l.b16 %v1098
    %v1816 = vunpack.c.h.b16 %v1098
    %v1817 = vunpack.c.l.b16 %v1099
    %v1818 = vunpack.c.h.b16 %v1099
    %v1819 = vunpack.c.l.b16 %v1100
    %v1820 = vunpack.c.h.b16 %v1100
    %v1821 = vunpack.c.l.b16 %v1101
    %v1822 = vunpack.c.h.b16 %v1101
    %v1823 = vunpack.c.l.b16 %v1102
    %v1824 = vunpack.c.h.b16 %v1102
    %v1825 = vunpack.c.l.b16 %v1103
    %v1826 = vunpack.c.h.b16 %v1103
    %v1827 = vunpack.c.l.b16 %v1104
    %v1828 = vunpack.c.h.b16 %v1104
    %v1829 = vunpack.c.l.b16 %v1105
    %v1830 = vunpack.c.h.b16 %v1105
    %v1831 = vunpack.c.l.b16 %v1106
    %v1832 = vunpack.c.h.b16 %v1106
    %v1833 = vunpack.c.l.b16 %v1107
    %v1834 = vunpack.c.h.b16 %v1107
    %v1835 = vunpack.c.l.b16 %v1108
    %v1836 = vunpack.c.h.b16 %v1108
    %v1837 = vunpack.c.l.b16 %v1109
    %v1838 = vunpack.c.h.b16 %v1109
    %v1839 = vunpack.c.l.b16 %v1110
    %v1840 = vunpack.c.h.b16 %v1110
    %v1841 = vunpack.c.l.b16 %v1111
    %v1842 = vunpack.c.h.b16 %v1111
    %v1843 = vunpack.c.l.b16 %v1112
    %v1844 = vunpack.c.h.b16 %v1112
    %v1845 = vunpack.c.l.b16 %v1113
    %v1846 = vunpack.c.h.b16 %v1113
    %v1847 = vunpack.c.l.b16 %v1114
    %v1848 = vunpack.c.h.b16 %v1114
    %v1849 = vunpack.c.l.b16 %v1115
    %v1850 = vunpack.c.h.b16 %v1115
    %v1851 = vunpack.c.l.b16 %v1116
    %v1852 = vunpack.c.h.b16 %v1116
    %v1853 = vunpack.c.l.b16 %v1117
    %v1854 = vunpack.c.h.b16 %v1117
    %v1855 = vunpack.c.l.b16 %v1118
    %v1856 = vunpack.c.h.b16 %v1118
    %v1857 = vunpack.c.l.b16 %v1119
    %v1858 = vunpack.c.h.b16 %v1119
    %v1859 = vunpack.c.l.b16 %v1120
    %v1860 = vunpack.c.h.b16 %v1120
    %v1861 = vunpack.c.l.b16 %v1121
    %v1862 = vunpack.c.h.b16 %v1121
    %v1863 = vunpack.c.l.b16 %v1122
    %v1864 = vunpack.c.h.b16 %v1122
    %v1865 = vunpack.c.l.b16 %v1123
    %v1866 = vunpack.c.h.b16 %v1123
    %v1867 = vunpack.c.l.b16 %v1124
    %v1868 = vunpack.c.h.b16 %v1124
    %v1869 = vunpack.c.l.b16 %v1125
    %v1870 = vunpack.c.h.b16 %v1125
    %v1871 = vunpack.c.l.b16 %v1126
    %v1872 = vunpack.c.h.b16 %v1126
    %v1873 = vunpack.c.l.b16 %v1127
    %v1874 = vunpack.c.h.b16 %v1127
    %v1875 = vunpack.c.l.b16 %v1128
    %v1876 = vunpack.c.h.b16 %v1128
    %v1877 = vunpack.c.l.b16 %v1129
    %v1878 = vunpack.c.h.b16 %v1129
    %v1879 = vunpack.c.l.b16 %v1130
    %v1880 = vunpack.c.h.b16 %v1130
    %v1881 = vunpack.c.l.b16 %v1131
    %v1882 = vunpack.c.h.b16 %v1131
    %v1883 = vunpack.c.l.b16 %v1132
    %v1884 = vunpack.c.h.b16 %v1132
    %v1885 = vunpack.c.l.b16 %v1133
    %v1886 = vunpack.c.h.b16 %v1133
    %v1887 = vunpack.c.l.b16 %v1134
    %v1888 = vunpack.c.h.b16 %v1134
    %v1889 = vunpack.c.l.b16 %v1135
    %v1890 = vunpack.c.h.b16 %v1135
    %v1891 = vunpack.c.l.b16 %v1136
    %v1892 = vunpack.c.h.b16 %v1136
    %v1893 = vunpack.c.l.b16 %v1137
    %v1894 = vunpack.c.h.b16 %v1137
    %v1895 = vunpack.c.l.b16 %v1138
    %v1896 = vunpack.c.h.b16 %v1138
    %v1897 = vunpack.c.l.b16 %v1139
    %v1898 = vunpack.c.h.b16 %v1139
    %v1899 = vunpack.c.l.b16 %v1140
    %v1900 = vunpack.c.h.b16 %v1140
    %v1901 = vunpack.c.l.b16 %v1141
    %v1902 = vunpack.c.h.b16 %v1141
    %v1903 = vunpack.c.l.b16 %v1142
    %v1904 = vunpack.c.h.b16 %v1142
    %v1905 = vunpack.c.l.b16 %v1143
    %v1906 = vunpack.c.h.b16 %v1143
    %v1907 = vunpack.c.l.b16 %v1144
    %v1908 = vunpack.c.h.b16 %v1144
    %v1909 = vunpack.c.l.b16 %v1145
    %v1910 = vunpack.c.h.b16 %v1145
    %v1911 = vunpack.c.l.b16 %v1146
    %v1912 = vunpack.c.h.b16 %v1146
    %v1913 = vunpack.c.l.b16 %v1147
    %v1914 = vunpack.c.h.b16 %v1147
    %v1915 = vunpack.c.l.b16 %v1148
    %v1916 = vunpack.c.h.b16 %v1148
    %v1917 = vpack.c.b16 %v1409, %v1405
    %v1918 = vpack.c.b16 %v1410, %v1406
    %v1919 = vpack.c.b16 %v1411, %v1407
    %v1920 = vpack.c.b16 %v1412, %v1408
    %v1921 = vpack.c.b16 %v1417, %v1413
    %v1922 = vpack.c.b16 %v1418, %v1414
    %v1923 = vpack.c.b16 %v1419, %v1415
    %v1924 = vpack.c.b16 %v1420, %v1416
    %v1925 = vpack.c.b16 %v1425, %v1421
    %v1926 = vpack.c.b16 %v1426, %v1422
    %v1927 = vpack.c.b16 %v1427, %v1423
    %v1928 = vpack.c.b16 %v1428, %v1424
    %v1929 = vpack.c.b16 %v1433, %v1429
    %v1930 = vpack.c.b16 %v1434, %v1430
    %v1931 = vpack.c.b16 %v1435, %v1431
    %v1932 = vpack.c.b16 %v1436, %v1432
    %v1933 = vpack.c.b16 %v1441, %v1437
    %v1934 = vpack.c.b16 %v1442, %v1438
    %v1935 = vpack.c.b16 %v1443, %v1439
    %v1936 = vpack.c.b16 %v1444, %v1440
    %v1937 = vpack.c.b16 %v1449, %v1445
    %v1938 = vpack.c.b16 %v1450, %v1446
    %v1939 = vpack.c.b16 %v1451, %v1447
    %v1940 = vpack.c.b16 %v1452, %v1448
    %v1941 = vpack.c.b16 %v1457, %v1453
    %v1942 = vpack.c.b16 %v1458, %v1454
    %v1943 = vpack.c.b16 %v1459, %v1455
    %v1944 = vpack.c.b16 %v1460, %v1456
    %v1945 = vpack.c.b16 %v1465, %v1461
    %v1946 = vpack.c.b16 %v1466, %v1462
    %v1947 = vpack.c.b16 %v1467, %v1463
    %v1948 = vpack.c.b16 %v1468, %v1464
    %v1949 = vpack.c.b16 %v1473, %v1469
    %v1950 = vpack.c.b16 %v1474, %v1470
    %v1951 = vpack.c.b16 %v1475, %v1471
    %v1952 = vpack.c.b16 %v1476, %v1472
    %v1953 = vpack.c.b16 %v1481, %v1477
    %v1954 = vpack.c.b16 %v1482, %v1478
    %v1955 = vpack.c.b16 %v1483, %v1479
    %v1956 = vpack.c.b16 %v1484, %v1480
    %v1957 = vpack.c.b16 %v1489, %v1485
    %v1958 = vpack.c.b16 %v1490, %v1486
    %v1959 = vpack.c.b16 %v1491, %v1487
    %v1960 = vpack.c.b16 %v1492, %v1488
    %v1961 = vpack.c.b16 %v1497, %v1493
    %v1962 = vpack.c.b16 %v1498, %v1494
    %v1963 = vpack.c.b16 %v1499, %v1495
    %v1964 = vpack.c.b16 %v1500, %v1496
    %v1965 = vpack.c.b16 %v1505, %v1501
    %v1966 = vpack.c.b16 %v1506, %v1502
    %v1967 = vpack.c.b16 %v1507, %v1503
    %v1968 = vpack.c.b16 %v1508, %v1504
    %v1969 = vpack.c.b16 %v1513, %v1509
    %v1970 = vpack.c.b16 %v1514, %v1510
    %v1971 = vpack.c.b16 %v1515, %v1511
    %v1972 = vpack.c.b16 %v1516, %v1512
    %v1973 = vpack.c.b16 %v1521, %v1517
    %v1974 = vpack.c.b16 %v1522, %v1518
    %v1975 = vpack.c.b16 %v1523, %v1519
    %v1976 = vpack.c.b16 %v1524, %v1520
    %v1977 = vpack.c.b16 %v1529, %v1525
    %v1978 = vpack.c.b16 %v1530, %v1526
    %v1979 = vpack.c.b16 %v1531, %v1527
    %v1980 = vpack.c.b16 %v1532, %v1528
    %v1981 = vpack.c.b16 %v1537, %v1533
    %v1982 = vpack.c.b16 %v1538, %v1534
    %v1983 = vpack.c.b16 %v1539, %v1535
    %v1984 = vpack.c.b16 %v1540, %v1536
    %v1985 = vpack.c.b16 %v1545, %v1541
    %v1986 = vpack.c.b16 %v1546, %v1542
    %v1987 = vpack.c.b16 %v1547, %v1543
    %v1988 = vpack.c.b16 %v1548, %v1544
    %v1989 = vpack.c.b16 %v1553, %v1549
    %v1990 = vpack.c.b16 %v1554, %v1550
    %v1991 = vpack.c.b16 %v1555, %v1551
    %v1992 = vpack.c.b16 %v1556, %v1552
    %v1993 = vpack.c.b16 %v1561, %v1557
    %v1994 = vpack.c.b16 %v1562, %v1558
    %v1995 = vpack.c.b16 %v1563, %v1559
    %v1996 = vpack.c.b16 %v1564, %v1560
    %v1997 = vpack.c.b16 %v1569, %v1565
    %v1998 = vpack.c.b16 %v1570, %v1566
    %v1999 = vpack.c.b16 %v1571, %v1567
    %v2000 = vpack.c.b16 %v1572, %v1568
    %v2001 = vpack.c.b16 %v1577, %v1573
    %v2002 = vpack.c.b16 %v1578, %v1574
    %v2003 = vpack.c.b16 %v1579, %v1575
    %v2004 = vpack.c.b16 %v1580, %v1576
    %v2005 = vpack.c.b16 %v1585, %v1581
    %v2006 = vpack.c.b16 %v1586, %v1582
    %v2007 = vpack.c.b16 %v1587, %v1583
    %v2008 = vpack.c.b16 %v1588, %v1584
    %v2009 = vpack.c.b16 %v1593, %v1589
    %v2010 = vpack.c.b16 %v1594, %v1590
    %v2011 = vpack.c.b16 %v1595, %v1591
    %v2012 = vpack.c.b16 %v1596, %v1592
    %v2013 = vpack.c.b16 %v1601, %v1597
    %v2014 = vpack.c.b16 %v1602, %v1598
    %v2015 = vpack.c.b16 %v1603, %v1599
    %v2016 = vpack.c.b16 %v1604, %v1600
    %v2017 = vpack.c.b16 %v1609, %v1605
    %v2018 = vpack.c.b16 %v1610, %v1606
    %v2019 = vpack.c.b16 %v1611, %v1607
    %v2020 = vpack.c.b16 %v1612, %v1608
    %v2021 = vpack.c.b16 %v1617, %v1613
    %v2022 = vpack.c.b16 %v1618, %v1614
    %v2023 = vpack.c.b16 %v1619, %v1615
    %v2024 = vpack.c.b16 %v1620, %v1616
    %v2025 = vpack.c.b16 %v1625, %v1621
    %v2026 = vpack.c.b16 %v1626, %v1622
    %v2027 = vpack.c.b16 %v1627, %v1623
    %v2028 = vpack.c.b16 %v1628, %v1624
    %v2029 = vpack.c.b16 %v1633, %v1629
    %v2030 = vpack.c.b16 %v1634, %v1630
    %v2031 = vpack.c.b16 %v1635, %v1631
    %v2032 = vpack.c.b16 %v1636, %v1632
    %v2033 = vpack.c.b16 %v1641, %v1637
    %v2034 = vpack.c.b16 %v1642, %v1638
    %v2035 = vpack.c.b16 %v1643, %v1639
    %v2036 = vpack.c.b16 %v1644, %v1640
    %v2037 = vpack.c.b16 %v1649, %v1645
    %v2038 = vpack.c.b16 %v1650, %v1646
    %v2039 = vpack.c.b16 %v1651, %v1647
    %v2040 = vpack.c.b16 %v1652, %v1648
    %v2041 = vpack.c.b16 %v1657, %v1653
    %v2042 = vpack.c.b16 %v1658, %v1654
    %v2043 = vpack.c.b16 %v1659, %v1655
    %v2044 = vpack.c.b16 %v1660, %v1656
    %v2045 = vpack.c.b16 %v1665, %v1661
    %v2046 = vpack.c.b16 %v1666, %v1662
    %v2047 = vpack.c.b16 %v1667, %v1663
    %v2048 = vpack.c.b16 %v1668, %v1664
    %v2049 = vpack.c.b16 %v1673, %v1669
    %v2050 = vpack.c.b16 %v1674, %v1670
    %v2051 = vpack.c.b16 %v1675, %v1671
    %v2052 = vpack.c.b16 %v1676, %v1672
    %v2053 = vpack.c.b16 %v1681, %v1677
    %v2054 = vpack.c.b16 %v1682, %v1678
    %v2055 = vpack.c.b16 %v1683, %v1679
    %v2056 = vpack.c.b16 %v1684, %v1680
    %v2057 = vpack.c.b16 %v1689, %v1685
    %v2058 = vpack.c.b16 %v1690, %v1686
    %v2059 = vpack.c.b16 %v1691, %v1687
    %v2060 = vpack.c.b16 %v1692, %v1688
    %v2061 = vpack.c.b16 %v1697, %v1693
    %v2062 = vpack.c.b16 %v1698, %v1694
    %v2063 = vpack.c.b16 %v1699, %v1695
    %v2064 = vpack.c.b16 %v1700, %v1696
    %v2065 = vpack.c.b16 %v1705, %v1701
    %v2066 = vpack.c.b16 %v1706, %v1702
    %v2067 = vpack.c.b16 %v1707, %v1703
    %v2068 = vpack.c.b16 %v1708, %v1704
    %v2069 = vpack.c.b16 %v1713, %v1709
    %v2070 = vpack.c.b16 %v1714, %v1710
    %v2071 = vpack.c.b16 %v1715, %v1711
    %v2072 = vpack.c.b16 %v1716, %v1712
    %v2073 = vpack.c.b16 %v1721, %v1717
    %v2074 = vpack.c.b16 %v1722, %v1718
    %v2075 = vpack.c.b16 %v1723, %v1719
    %v2076 = vpack.c.b16 %v1724, %v1720
    %v2077 = vpack.c.b16 %v1729, %v1725
    %v2078 = vpack.c.b16 %v1730, %v1726
    %v2079 = vpack.c.b16 %v1731, %v1727
    %v2080 = vpack.c.b16 %v1732, %v1728
    %v2081 = vpack.c.b16 %v1737, %v1733
    %v2082 = vpack.c.b16 %v1738, %v1734
    %v2083 = vpack.c.b16 %v1739, %v1735
    %v2084 = vpack.c.b16 %v1740, %v1736
    %v2085 = vpack.c.b16 %v1745, %v1741
    %v2086 = vpack.c.b16 %v1746, %v1742
    %v2087 = vpack.c.b16 %v1747, %v1743
    %v2088 = vpack.c.b16 %v1748, %v1744
    %v2089 = vpack.c.b16 %v1753, %v1749
    %v2090 = vpack.c.b16 %v1754, %v1750
    %v2091 = vpack.c.b16 %v1755, %v1751
    %v2092 = vpack.c.b16 %v1756, %v1752
    %v2093 = vpack.c.b16 %v1761, %v1757
    %v2094 = vpack.c.b16 %v1762, %v1758
    %v2095 = vpack.c.b16 %v1763, %v1759
    %v2096 = vpack.c.b16 %v1764, %v1760
    %v2097 = vpack.c.b16 %v1769, %v1765
    %v2098 = vpack.c.b16 %v1770, %v1766
    %v2099 = vpack.c.b16 %v1771, %v1767
    %v2100 = vpack.c.b16 %v1772, %v1768
    %v2101 = vpack.c.b16 %v1777, %v1773
    %v2102 = vpack.c.b16 %v1778, %v1774
    %v2103 = vpack.c.b16 %v1779, %v1775
    %v2104 = vpack.c.b16 %v1780, %v1776
    %v2105 = vpack.c.b16 %v1785, %v1781
    %v2106 = vpack.c.b16 %v1786, %v1782
    %v2107 = vpack.c.b16 %v1787, %v1783
    %v2108 = vpack.c.b16 %v1788, %v1784
    %v2109 = vpack.c.b16 %v1793, %v1789
    %v2110 = vpack.c.b16 %v1794, %v1790
    %v2111 = vpack.c.b16 %v1795, %v1791
    %v2112 = vpack.c.b16 %v1796, %v1792
    %v2113 = vpack.c.b16 %v1801, %v1797
    %v2114 = vpack.c.b16 %v1802, %v1798
    %v2115 = vpack.c.b16 %v1803, %v1799
    %v2116 = vpack.c.b16 %v1804, %v1800
    %v2117 = vpack.c.b16 %v1809, %v1805
    %v2118 = vpack.c.b16 %v1810, %v1806
    %v2119 = vpack.c.b16 %v1811, %v1807
    %v2120 = vpack.c.b16 %v1812, %v1808
    %v2121 = vpack.c.b16 %v1817, %v1813
    %v2122 = vpack.c.b16 %v1818, %v1814
    %v2123 = vpack.c.b16 %v1819, %v1815
    %v2124 = vpack.c.b16 %v1820, %v1816
    %v2125 = vpack.c.b16 %v1825, %v1821
    %v2126 = vpack.c.b16 %v1826, %v1822
    %v2127 = vpack.c.b16 %v1827, %v1823
    %v2128 = vpack.c.b16 %v1828, %v1824
    %v2129 = vpack.c.b16 %v1833, %v1829
    %v2130 = vpack.c.b16 %v1834, %v1830
    %v2131 = vpack.c.b16 %v1835, %v1831
    %v2132 = vpack.c.b16 %v1836, %v1832
    %v2133 = vpack.c.b16 %v1841, %v1837
    %v2134 = vpack.c.b16 %v1842, %v1838
    %v2135 = vpack.c.b16 %v1843, %v1839
    %v2136 = vpack.c.b16 %v1844, %v1840
    %v2137 = vpack.c.b16 %v1849, %v1845
    %v2138 = vpack.c.b16 %v1850, %v1846
    %v2139 = vpack.c.b16 %v1851, %v1847
    %v2140 = vpack.c.b16 %v1852, %v1848
    %v2141 = vpack.c.b16 %v1857, %v1853
    %v2142 = vpack.c.b16 %v1858, %v1854
    %v2143 = vpack.c.b16 %v1859, %v1855
    %v2144 = vpack.c.b16 %v1860, %v1856
    %v2145 = vpack.c.b16 %v1865, %v1861
    %v2146 = vpack.c.b16 %v1866, %v1862
    %v2147 = vpack.c.b16 %v1867, %v1863
    %v2148 = vpack.c.b16 %v1868, %v1864
    %v2149 = vpack.c.b16 %v1873, %v1869
    %v2150 = vpack.c.b16 %v1874, %v1870
    %v2151 = vpack.c.b16 %v1875, %v1871
    %v2152 = vpack.c.b16 %v1876, %v1872
    %v2153 = vpack.c.b16 %v1881, %v1877
    %v2154 = vpack.c.b16 %v1882, %v1878
    %v2155 = vpack.c.b16 %v1883, %v1879
    %v2156 = vpack.c.b16 %v1884, %v1880
    %v2157 = vpack.c.b16 %v1889, %v1885
    %v2158 = vpack.c.b16 %v1890, %v1886
    %v2159 = vpack.c.b16 %v1891, %v1887
    %v2160 = vpack.c.b16 %v1892, %v1888
    %v2161 = vpack.c.b16 %v1897, %v1893
    %v2162 = vpack.c.b16 %v1898, %v1894
    %v2163 = vpack.c.b16 %v1899, %v1895
    %v2164 = vpack.c.b16 %v1900, %v1896
    %v2165 = vpack.c.b16 %v1905, %v1901
    %v2166 = vpack.c.b16 %v1906, %v1902
    %v2167 = vpack.c.b16 %v1907, %v1903
    %v2168 = vpack.c.b16 %v1908, %v1904
    %v2169 = vpack.c.b16 %v1913, %v1909
    %v2170 = vpack.c.b16 %v1914, %v1910
    %v2171 = vpack.c.b16 %v1915, %v1911
    %v2172 = vpack.c.b16 %v1916, %v1912
    %2429 = vmatpush.bf16.msra.mxu0 %v1945
    %2430 = vmatpush.bf16.msra.mxu0 %v1941
    %2431 = vmatpush.bf16.msra.mxu0 %v1937
    %2432 = vmatpush.bf16.msra.mxu0 %v1933
    %2433 = vmatpush.bf16.msra.mxu0 %v1929
    %2434 = vmatpush.bf16.msra.mxu0 %v1925
    %2435 = vmatpush.bf16.msra.mxu0 %v1921
    %2436 = vmatpush.bf16.msra.mxu0 %v1917
    %2437 = vmatmul.bf16.gmra.mxu0 %v885
    %v2438 = vpop.f32.mrf.mxu0
    %v2439 = vadd.f32 0.0, %v2438
    %v2440 = vpop.f32.mrf.mxu0
    %2441 = vdwg.mxu0
    %2442 = vmatpush.bf16.msra.mxu0 %v1977
    %2443 = vmatpush.bf16.msra.mxu0 %v1973
    %2444 = vmatpush.bf16.msra.mxu0 %v1969
    %2445 = vmatpush.bf16.msra.mxu0 %v1965
    %2446 = vmatpush.bf16.msra.mxu0 %v1961
    %2447 = vmatpush.bf16.msra.mxu0 %v1957
    %2448 = vmatpush.bf16.msra.mxu0 %v1953
    %2449 = vmatpush.bf16.msra.mxu0 %v1949
    %2450 = vmatmul.bf16.gmra.mxu0 %v886
    %v2451 = vpop.f32.mrf.mxu0
    %v2452 = vadd.f32 %v2439, %v2451
    %v2453 = vpop.f32.mrf.mxu0
    %2454 = vdwg.mxu0
    %2455 = vmatpush.bf16.msra.mxu0 %v2009
    %2456 = vmatpush.bf16.msra.mxu0 %v2005
    %2457 = vmatpush.bf16.msra.mxu0 %v2001
    %2458 = vmatpush.bf16.msra.mxu0 %v1997
    %2459 = vmatpush.bf16.msra.mxu0 %v1993
    %2460 = vmatpush.bf16.msra.mxu0 %v1989
    %2461 = vmatpush.bf16.msra.mxu0 %v1985
    %2462 = vmatpush.bf16.msra.mxu0 %v1981
    %2463 = vmatmul.bf16.gmra.mxu0 %v887
    %v2464 = vpop.f32.mrf.mxu0
    %v2465 = vadd.f32 %v2452, %v2464
    %v2466 = vpop.f32.mrf.mxu0
    %2467 = vdwg.mxu0
    %2468 = vmatpush.bf16.msra.mxu0 %v2041
    %2469 = vmatpush.bf16.msra.mxu0 %v2037
    %2470 = vmatpush.bf16.msra.mxu0 %v2033
    %2471 = vmatpush.bf16.msra.mxu0 %v2029
    %2472 = vmatpush.bf16.msra.mxu0 %v2025
    %2473 = vmatpush.bf16.msra.mxu0 %v2021
    %2474 = vmatpush.bf16.msra.mxu0 %v2017
    %2475 = vmatpush.bf16.msra.mxu0 %v2013
    %2476 = vmatmul.bf16.gmra.mxu0 %v888
    %v2477 = vpop.f32.mrf.mxu0
    %v2478 = vadd.f32 %v2465, %v2477
    %v2479 = vpop.f32.mrf.mxu0
    %2480 = vdwg.mxu0
    %2481 = vmatpush.bf16.msra.mxu0 %v2073
    %2482 = vmatpush.bf16.msra.mxu0 %v2069
    %2483 = vmatpush.bf16.msra.mxu0 %v2065
    %2484 = vmatpush.bf16.msra.mxu0 %v2061
    %2485 = vmatpush.bf16.msra.mxu0 %v2057
    %2486 = vmatpush.bf16.msra.mxu0 %v2053
    %2487 = vmatpush.bf16.msra.mxu0 %v2049
    %2488 = vmatpush.bf16.msra.mxu0 %v2045
    %2489 = vmatmul.bf16.gmra.mxu0 %v889
    %v2490 = vpop.f32.mrf.mxu0
    %v2491 = vadd.f32 %v2478, %v2490
    %v2492 = vpop.f32.mrf.mxu0
    %2493 = vdwg.mxu0
    %2494 = vmatpush.bf16.msra.mxu0 %v2105
    %2495 = vmatpush.bf16.msra.mxu0 %v2101
    %2496 = vmatpush.bf16.msra.mxu0 %v2097
    %2497 = vmatpush.bf16.msra.mxu0 %v2093
    %2498 = vmatpush.bf16.msra.mxu0 %v2089
    %2499 = vmatpush.bf16.msra.mxu0 %v2085
    %2500 = vmatpush.bf16.msra.mxu0 %v2081
    %2501 = vmatpush.bf16.msra.mxu0 %v2077
    %2502 = vmatmul.bf16.gmra.mxu0 %v890
    %v2503 = vpop.f32.mrf.mxu0
    %v2504 = vadd.f32 %v2491, %v2503
    %v2505 = vpop.f32.mrf.mxu0
    %2506 = vdwg.mxu0
    %2507 = vmatpush.bf16.msra.mxu0 %v2137
    %2508 = vmatpush.bf16.msra.mxu0 %v2133
    %2509 = vmatpush.bf16.msra.mxu0 %v2129
    %2510 = vmatpush.bf16.msra.mxu0 %v2125
    %2511 = vmatpush.bf16.msra.mxu0 %v2121
    %2512 = vmatpush.bf16.msra.mxu0 %v2117
    %2513 = vmatpush.bf16.msra.mxu0 %v2113
    %2514 = vmatpush.bf16.msra.mxu0 %v2109
    %2515 = vmatmul.bf16.gmra.mxu0 %v891
    %v2516 = vpop.f32.mrf.mxu0
    %v2517 = vadd.f32 %v2504, %v2516
    %v2518 = vpop.f32.mrf.mxu0
    %2519 = vdwg.mxu0
    %2520 = vmatpush.bf16.msra.mxu0 %v2169
    %2521 = vmatpush.bf16.msra.mxu0 %v2165
    %2522 = vmatpush.bf16.msra.mxu0 %v2161
    %2523 = vmatpush.bf16.msra.mxu0 %v2157
    %2524 = vmatpush.bf16.msra.mxu0 %v2153
    %2525 = vmatpush.bf16.msra.mxu0 %v2149
    %2526 = vmatpush.bf16.msra.mxu0 %v2145
    %2527 = vmatpush.bf16.msra.mxu0 %v2141
    %2528 = vmatmul.bf16.gmra.mxu0 %v892
    %v2529 = vpop.f32.mrf.mxu0
    %v2530 = vadd.f32 %v2517, %v2529
    %v2531 = vpop.f32.mrf.mxu0
    %2532 = vdwg.mxu0
    %2533 = vmatpush.bf16.msra.mxu0 %v1946
    %2534 = vmatpush.bf16.msra.mxu0 %v1942
    %2535 = vmatpush.bf16.msra.mxu0 %v1938
    %2536 = vmatpush.bf16.msra.mxu0 %v1934
    %2537 = vmatpush.bf16.msra.mxu0 %v1930
    %2538 = vmatpush.bf16.msra.mxu0 %v1926
    %2539 = vmatpush.bf16.msra.mxu0 %v1922
    %2540 = vmatpush.bf16.msra.mxu0 %v1918
    %2541 = vmatmul.bf16.gmra.mxu0 %v885
    %v2542 = vpop.f32.mrf.mxu0
    %v2543 = vadd.f32 0.0, %v2542
    %v2544 = vpop.f32.mrf.mxu0
    %2545 = vdwg.mxu0
    %2546 = vmatpush.bf16.msra.mxu0 %v1978
    %2547 = vmatpush.bf16.msra.mxu0 %v1974
    %2548 = vmatpush.bf16.msra.mxu0 %v1970
    %2549 = vmatpush.bf16.msra.mxu0 %v1966
    %2550 = vmatpush.bf16.msra.mxu0 %v1962
    %2551 = vmatpush.bf16.msra.mxu0 %v1958
    %2552 = vmatpush.bf16.msra.mxu0 %v1954
    %2553 = vmatpush.bf16.msra.mxu0 %v1950
    %2554 = vmatmul.bf16.gmra.mxu0 %v886
    %v2555 = vpop.f32.mrf.mxu0
    %v2556 = vadd.f32 %v2543, %v2555
    %v2557 = vpop.f32.mrf.mxu0
    %2558 = vdwg.mxu0
    %2559 = vmatpush.bf16.msra.mxu0 %v2010
    %2560 = vmatpush.bf16.msra.mxu0 %v2006
    %2561 = vmatpush.bf16.msra.mxu0 %v2002
    %2562 = vmatpush.bf16.msra.mxu0 %v1998
    %2563 = vmatpush.bf16.msra.mxu0 %v1994
    %2564 = vmatpush.bf16.msra.mxu0 %v1990
    %2565 = vmatpush.bf16.msra.mxu0 %v1986
    %2566 = vmatpush.bf16.msra.mxu0 %v1982
    %2567 = vmatmul.bf16.gmra.mxu0 %v887
    %v2568 = vpop.f32.mrf.mxu0
    %v2569 = vadd.f32 %v2556, %v2568
    %v2570 = vpop.f32.mrf.mxu0
    %2571 = vdwg.mxu0
    %2572 = vmatpush.bf16.msra.mxu0 %v2042
    %2573 = vmatpush.bf16.msra.mxu0 %v2038
    %2574 = vmatpush.bf16.msra.mxu0 %v2034
    %2575 = vmatpush.bf16.msra.mxu0 %v2030
    %2576 = vmatpush.bf16.msra.mxu0 %v2026
    %2577 = vmatpush.bf16.msra.mxu0 %v2022
    %2578 = vmatpush.bf16.msra.mxu0 %v2018
    %2579 = vmatpush.bf16.msra.mxu0 %v2014
    %2580 = vmatmul.bf16.gmra.mxu0 %v888
    %v2581 = vpop.f32.mrf.mxu0
    %v2582 = vadd.f32 %v2569, %v2581
    %v2583 = vpop.f32.mrf.mxu0
    %2584 = vdwg.mxu0
    %2585 = vmatpush.bf16.msra.mxu0 %v2074
    %2586 = vmatpush.bf16.msra.mxu0 %v2070
    %2587 = vmatpush.bf16.msra.mxu0 %v2066
    %2588 = vmatpush.bf16.msra.mxu0 %v2062
    %2589 = vmatpush.bf16.msra.mxu0 %v2058
    %2590 = vmatpush.bf16.msra.mxu0 %v2054
    %2591 = vmatpush.bf16.msra.mxu0 %v2050
    %2592 = vmatpush.bf16.msra.mxu0 %v2046
    %2593 = vmatmul.bf16.gmra.mxu0 %v889
    %v2594 = vpop.f32.mrf.mxu0
    %v2595 = vadd.f32 %v2582, %v2594
    %v2596 = vpop.f32.mrf.mxu0
    %2597 = vdwg.mxu0
    %2598 = vmatpush.bf16.msra.mxu0 %v2106
    %2599 = vmatpush.bf16.msra.mxu0 %v2102
    %2600 = vmatpush.bf16.msra.mxu0 %v2098
    %2601 = vmatpush.bf16.msra.mxu0 %v2094
    %2602 = vmatpush.bf16.msra.mxu0 %v2090
    %2603 = vmatpush.bf16.msra.mxu0 %v2086
    %2604 = vmatpush.bf16.msra.mxu0 %v2082
    %2605 = vmatpush.bf16.msra.mxu0 %v2078
    %2606 = vmatmul.bf16.gmra.mxu0 %v890
    %v2607 = vpop.f32.mrf.mxu0
    %v2608 = vadd.f32 %v2595, %v2607
    %v2609 = vpop.f32.mrf.mxu0
    %2610 = vdwg.mxu0
    %2611 = vmatpush.bf16.msra.mxu0 %v2138
    %2612 = vmatpush.bf16.msra.mxu0 %v2134
    %2613 = vmatpush.bf16.msra.mxu0 %v2130
    %2614 = vmatpush.bf16.msra.mxu0 %v2126
    %2615 = vmatpush.bf16.msra.mxu0 %v2122
    %2616 = vmatpush.bf16.msra.mxu0 %v2118
    %2617 = vmatpush.bf16.msra.mxu0 %v2114
    %2618 = vmatpush.bf16.msra.mxu0 %v2110
    %2619 = vmatmul.bf16.gmra.mxu0 %v891
    %v2620 = vpop.f32.mrf.mxu0
    %v2621 = vadd.f32 %v2608, %v2620
    %v2622 = vpop.f32.mrf.mxu0
    %2623 = vdwg.mxu0
    %2624 = vmatpush.bf16.msra.mxu0 %v2170
    %2625 = vmatpush.bf16.msra.mxu0 %v2166
    %2626 = vmatpush.bf16.msra.mxu0 %v2162
    %2627 = vmatpush.bf16.msra.mxu0 %v2158
    %2628 = vmatpush.bf16.msra.mxu0 %v2154
    %2629 = vmatpush.bf16.msra.mxu0 %v2150
    %2630 = vmatpush.bf16.msra.mxu0 %v2146
    %2631 = vmatpush.bf16.msra.mxu0 %v2142
    %2632 = vmatmul.bf16.gmra.mxu0 %v892
    %v2633 = vpop.f32.mrf.mxu0
    %v2634 = vadd.f32 %v2621, %v2633
    %v2635 = vpop.f32.mrf.mxu0
    %2636 = vdwg.mxu0
    %2637 = vmatpush.bf16.msra.mxu0 %v1947
    %2638 = vmatpush.bf16.msra.mxu0 %v1943
    %2639 = vmatpush.bf16.msra.mxu0 %v1939
    %2640 = vmatpush.bf16.msra.mxu0 %v1935
    %2641 = vmatpush.bf16.msra.mxu0 %v1931
    %2642 = vmatpush.bf16.msra.mxu0 %v1927
    %2643 = vmatpush.bf16.msra.mxu0 %v1923
    %2644 = vmatpush.bf16.msra.mxu0 %v1919
    %2645 = vmatmul.bf16.gmra.mxu0 %v885
    %v2646 = vpop.f32.mrf.mxu0
    %v2647 = vadd.f32 0.0, %v2646
    %v2648 = vpop.f32.mrf.mxu0
    %2649 = vdwg.mxu0
    %2650 = vmatpush.bf16.msra.mxu0 %v1979
    %2651 = vmatpush.bf16.msra.mxu0 %v1975
    %2652 = vmatpush.bf16.msra.mxu0 %v1971
    %2653 = vmatpush.bf16.msra.mxu0 %v1967
    %2654 = vmatpush.bf16.msra.mxu0 %v1963
    %2655 = vmatpush.bf16.msra.mxu0 %v1959
    %2656 = vmatpush.bf16.msra.mxu0 %v1955
    %2657 = vmatpush.bf16.msra.mxu0 %v1951
    %2658 = vmatmul.bf16.gmra.mxu0 %v886
    %v2659 = vpop.f32.mrf.mxu0
    %v2660 = vadd.f32 %v2647, %v2659
    %v2661 = vpop.f32.mrf.mxu0
    %2662 = vdwg.mxu0
    %2663 = vmatpush.bf16.msra.mxu0 %v2011
    %2664 = vmatpush.bf16.msra.mxu0 %v2007
    %2665 = vmatpush.bf16.msra.mxu0 %v2003
    %2666 = vmatpush.bf16.msra.mxu0 %v1999
    %2667 = vmatpush.bf16.msra.mxu0 %v1995
    %2668 = vmatpush.bf16.msra.mxu0 %v1991
    %2669 = vmatpush.bf16.msra.mxu0 %v1987
    %2670 = vmatpush.bf16.msra.mxu0 %v1983
    %2671 = vmatmul.bf16.gmra.mxu0 %v887
    %v2672 = vpop.f32.mrf.mxu0
    %v2673 = vadd.f32 %v2660, %v2672
    %v2674 = vpop.f32.mrf.mxu0
    %2675 = vdwg.mxu0
    %2676 = vmatpush.bf16.msra.mxu0 %v2043
    %2677 = vmatpush.bf16.msra.mxu0 %v2039
    %2678 = vmatpush.bf16.msra.mxu0 %v2035
    %2679 = vmatpush.bf16.msra.mxu0 %v2031
    %2680 = vmatpush.bf16.msra.mxu0 %v2027
    %2681 = vmatpush.bf16.msra.mxu0 %v2023
    %2682 = vmatpush.bf16.msra.mxu0 %v2019
    %2683 = vmatpush.bf16.msra.mxu0 %v2015
    %2684 = vmatmul.bf16.gmra.mxu0 %v888
    %v2685 = vpop.f32.mrf.mxu0
    %v2686 = vadd.f32 %v2673, %v2685
    %v2687 = vpop.f32.mrf.mxu0
    %2688 = vdwg.mxu0
    %2689 = vmatpush.bf16.msra.mxu0 %v2075
    %2690 = vmatpush.bf16.msra.mxu0 %v2071
    %2691 = vmatpush.bf16.msra.mxu0 %v2067
    %2692 = vmatpush.bf16.msra.mxu0 %v2063
    %2693 = vmatpush.bf16.msra.mxu0 %v2059
    %2694 = vmatpush.bf16.msra.mxu0 %v2055
    %2695 = vmatpush.bf16.msra.mxu0 %v2051
    %2696 = vmatpush.bf16.msra.mxu0 %v2047
    %2697 = vmatmul.bf16.gmra.mxu0 %v889
    %v2698 = vpop.f32.mrf.mxu0
    %v2699 = vadd.f32 %v2686, %v2698
    %v2700 = vpop.f32.mrf.mxu0
    %2701 = vdwg.mxu0
    %2702 = vmatpush.bf16.msra.mxu0 %v2107
    %2703 = vmatpush.bf16.msra.mxu0 %v2103
    %2704 = vmatpush.bf16.msra.mxu0 %v2099
    %2705 = vmatpush.bf16.msra.mxu0 %v2095
    %2706 = vmatpush.bf16.msra.mxu0 %v2091
    %2707 = vmatpush.bf16.msra.mxu0 %v2087
    %2708 = vmatpush.bf16.msra.mxu0 %v2083
    %2709 = vmatpush.bf16.msra.mxu0 %v2079
    %2710 = vmatmul.bf16.gmra.mxu0 %v890
    %v2711 = vpop.f32.mrf.mxu0
    %v2712 = vadd.f32 %v2699, %v2711
    %v2713 = vpop.f32.mrf.mxu0
    %2714 = vdwg.mxu0
    %2715 = vmatpush.bf16.msra.mxu0 %v2139
    %2716 = vmatpush.bf16.msra.mxu0 %v2135
    %2717 = vmatpush.bf16.msra.mxu0 %v2131
    %2718 = vmatpush.bf16.msra.mxu0 %v2127
    %2719 = vmatpush.bf16.msra.mxu0 %v2123
    %2720 = vmatpush.bf16.msra.mxu0 %v2119
    %2721 = vmatpush.bf16.msra.mxu0 %v2115
    %2722 = vmatpush.bf16.msra.mxu0 %v2111
    %2723 = vmatmul.bf16.gmra.mxu0 %v891
    %v2724 = vpop.f32.mrf.mxu0
    %v2725 = vadd.f32 %v2712, %v2724
    %v2726 = vpop.f32.mrf.mxu0
    %2727 = vdwg.mxu0
    %2728 = vmatpush.bf16.msra.mxu0 %v2171
    %2729 = vmatpush.bf16.msra.mxu0 %v2167
    %2730 = vmatpush.bf16.msra.mxu0 %v2163
    %2731 = vmatpush.bf16.msra.mxu0 %v2159
    %2732 = vmatpush.bf16.msra.mxu0 %v2155
    %2733 = vmatpush.bf16.msra.mxu0 %v2151
    %2734 = vmatpush.bf16.msra.mxu0 %v2147
    %2735 = vmatpush.bf16.msra.mxu0 %v2143
    %2736 = vmatmul.bf16.gmra.mxu0 %v892
    %v2737 = vpop.f32.mrf.mxu0
    %v2738 = vadd.f32 %v2725, %v2737
    %v2739 = vpop.f32.mrf.mxu0
    %2740 = vdwg.mxu0
    %2741 = vmatpush.bf16.msra.mxu0 %v1948
    %2742 = vmatpush.bf16.msra.mxu0 %v1944
    %2743 = vmatpush.bf16.msra.mxu0 %v1940
    %2744 = vmatpush.bf16.msra.mxu0 %v1936
    %2745 = vmatpush.bf16.msra.mxu0 %v1932
    %2746 = vmatpush.bf16.msra.mxu0 %v1928
    %2747 = vmatpush.bf16.msra.mxu0 %v1924
    %2748 = vmatpush.bf16.msra.mxu0 %v1920
    %2749 = vmatmul.bf16.gmra.mxu0 %v885
    %v2750 = vpop.f32.mrf.mxu0
    %v2751 = vadd.f32 0.0, %v2750
    %v2752 = vpop.f32.mrf.mxu0
    %2753 = vdwg.mxu0
    %2754 = vmatpush.bf16.msra.mxu0 %v1980
    %2755 = vmatpush.bf16.msra.mxu0 %v1976
    %2756 = vmatpush.bf16.msra.mxu0 %v1972
    %2757 = vmatpush.bf16.msra.mxu0 %v1968
    %2758 = vmatpush.bf16.msra.mxu0 %v1964
    %2759 = vmatpush.bf16.msra.mxu0 %v1960
    %2760 = vmatpush.bf16.msra.mxu0 %v1956
    %2761 = vmatpush.bf16.msra.mxu0 %v1952
    %2762 = vmatmul.bf16.gmra.mxu0 %v886
    %v2763 = vpop.f32.mrf.mxu0
    %v2764 = vadd.f32 %v2751, %v2763
    %v2765 = vpop.f32.mrf.mxu0
    %2766 = vdwg.mxu0
    %2767 = vmatpush.bf16.msra.mxu0 %v2012
    %2768 = vmatpush.bf16.msra.mxu0 %v2008
    %2769 = vmatpush.bf16.msra.mxu0 %v2004
    %2770 = vmatpush.bf16.msra.mxu0 %v2000
    %2771 = vmatpush.bf16.msra.mxu0 %v1996
    %2772 = vmatpush.bf16.msra.mxu0 %v1992
    %2773 = vmatpush.bf16.msra.mxu0 %v1988
    %2774 = vmatpush.bf16.msra.mxu0 %v1984
    %2775 = vmatmul.bf16.gmra.mxu0 %v887
    %v2776 = vpop.f32.mrf.mxu0
    %v2777 = vadd.f32 %v2764, %v2776
    %v2778 = vpop.f32.mrf.mxu0
    %2779 = vdwg.mxu0
    %2780 = vmatpush.bf16.msra.mxu0 %v2044
    %2781 = vmatpush.bf16.msra.mxu0 %v2040
    %2782 = vmatpush.bf16.msra.mxu0 %v2036
    %2783 = vmatpush.bf16.msra.mxu0 %v2032
    %2784 = vmatpush.bf16.msra.mxu0 %v2028
    %2785 = vmatpush.bf16.msra.mxu0 %v2024
    %2786 = vmatpush.bf16.msra.mxu0 %v2020
    %2787 = vmatpush.bf16.msra.mxu0 %v2016
    %2788 = vmatmul.bf16.gmra.mxu0 %v888
    %v2789 = vpop.f32.mrf.mxu0
    %v2790 = vadd.f32 %v2777, %v2789
    %v2791 = vpop.f32.mrf.mxu0
    %2792 = vdwg.mxu0
    %2793 = vmatpush.bf16.msra.mxu0 %v2076
    %2794 = vmatpush.bf16.msra.mxu0 %v2072
    %2795 = vmatpush.bf16.msra.mxu0 %v2068
    %2796 = vmatpush.bf16.msra.mxu0 %v2064
    %2797 = vmatpush.bf16.msra.mxu0 %v2060
    %2798 = vmatpush.bf16.msra.mxu0 %v2056
    %2799 = vmatpush.bf16.msra.mxu0 %v2052
    %2800 = vmatpush.bf16.msra.mxu0 %v2048
    %2801 = vmatmul.bf16.gmra.mxu0 %v889
    %v2802 = vpop.f32.mrf.mxu0
    %v2803 = vadd.f32 %v2790, %v2802
    %v2804 = vpop.f32.mrf.mxu0
    %2805 = vdwg.mxu0
    %2806 = vmatpush.bf16.msra.mxu0 %v2108
    %2807 = vmatpush.bf16.msra.mxu0 %v2104
    %2808 = vmatpush.bf16.msra.mxu0 %v2100
    %2809 = vmatpush.bf16.msra.mxu0 %v2096
    %2810 = vmatpush.bf16.msra.mxu0 %v2092
    %2811 = vmatpush.bf16.msra.mxu0 %v2088
    %2812 = vmatpush.bf16.msra.mxu0 %v2084
    %2813 = vmatpush.bf16.msra.mxu0 %v2080
    %2814 = vmatmul.bf16.gmra.mxu0 %v890
    %v2815 = vpop.f32.mrf.mxu0
    %v2816 = vadd.f32 %v2803, %v2815
    %v2817 = vpop.f32.mrf.mxu0
    %2818 = vdwg.mxu0
    %2819 = vmatpush.bf16.msra.mxu0 %v2140
    %2820 = vmatpush.bf16.msra.mxu0 %v2136
    %2821 = vmatpush.bf16.msra.mxu0 %v2132
    %2822 = vmatpush.bf16.msra.mxu0 %v2128
    %2823 = vmatpush.bf16.msra.mxu0 %v2124
    %2824 = vmatpush.bf16.msra.mxu0 %v2120
    %2825 = vmatpush.bf16.msra.mxu0 %v2116
    %2826 = vmatpush.bf16.msra.mxu0 %v2112
    %2827 = vmatmul.bf16.gmra.mxu0 %v891
    %v2828 = vpop.f32.mrf.mxu0
    %v2829 = vadd.f32 %v2816, %v2828
    %v2830 = vpop.f32.mrf.mxu0
    %2831 = vdwg.mxu0
    %2832 = vmatpush.bf16.msra.mxu0 %v2172
    %2833 = vmatpush.bf16.msra.mxu0 %v2168
    %2834 = vmatpush.bf16.msra.mxu0 %v2164
    %2835 = vmatpush.bf16.msra.mxu0 %v2160
    %2836 = vmatpush.bf16.msra.mxu0 %v2156
    %2837 = vmatpush.bf16.msra.mxu0 %v2152
    %2838 = vmatpush.bf16.msra.mxu0 %v2148
    %2839 = vmatpush.bf16.msra.mxu0 %v2144
    %2840 = vmatmul.bf16.gmra.mxu0 %v892
    %v2841 = vpop.f32.mrf.mxu0
    %v2842 = vadd.f32 %v2829, %v2841
    %v2843 = vpop.f32.mrf.mxu0
    %2844 = vdwg.mxu0
    %v2845 = vld [vmem:[%s4] sm:$0xff]
    %v2846 = vrot.slane %v2530, 4
    %v2847 = vadd.f32 %v2530, %v2846
    %v2848 = vrot.slane %v2847, 2
    %v2849 = vadd.f32 %v2847, %v2848
    %v2850 = vrot.slane %v2849, 1
    %v2851 = vadd.f32 %v2849, %v2850
    %v2852 = vrot.slane %v2634, 4
    %v2853 = vadd.f32 %v2634, %v2852
    %v2854 = vrot.slane %v2853, 2
    %v2855 = vadd.f32 %v2853, %v2854
    %v2856 = vrot.slane %v2855, 1
    %v2857 = vadd.f32 %v2855, %v2856
    %v2858 = vrot.slane %v2738, 4
    %v2859 = vadd.f32 %v2738, %v2858
    %v2860 = vrot.slane %v2859, 2
    %v2861 = vadd.f32 %v2859, %v2860
    %v2862 = vrot.slane %v2861, 1
    %v2863 = vadd.f32 %v2861, %v2862
    %v2864 = vrot.slane %v2842, 4
    %v2865 = vadd.f32 %v2842, %v2864
    %v2866 = vrot.slane %v2865, 2
    %v2867 = vadd.f32 %v2865, %v2866
    %v2868 = vrot.slane %v2867, 1
    %v2869 = vadd.f32 %v2867, %v2868
    %v2870 = vmul.f32 %v2851, %v618
    %v2871 = vmul.f32 %v2857, %v618
    %v2872 = vmul.f32 %v2863, %v618
    %v2873 = vmul.f32 %v2869, %v618
    %v2874 = vsub.f32 %v2530, %v2870
    %v2875 = vsub.f32 %v2634, %v2871
    %v2876 = vsub.f32 %v2738, %v2872
    %v2877 = vsub.f32 %v2842, %v2873
    %v2878 = vmul.f32 %v2874, %v2874
    %v2879 = vmul.f32 %v2875, %v2875
    %v2880 = vmul.f32 %v2876, %v2876
    %v2881 = vmul.f32 %v2877, %v2877
    %v2882 = vrot.slane %v2878, 4
    %v2883 = vadd.f32 %v2878, %v2882
    %v2884 = vrot.slane %v2883, 2
    %v2885 = vadd.f32 %v2883, %v2884
    %v2886 = vrot.slane %v2885, 1
    %v2887 = vadd.f32 %v2885, %v2886
    %v2888 = vrot.slane %v2879, 4
    %v2889 = vadd.f32 %v2879, %v2888
    %v2890 = vrot.slane %v2889, 2
    %v2891 = vadd.f32 %v2889, %v2890
    %v2892 = vrot.slane %v2891, 1
    %v2893 = vadd.f32 %v2891, %v2892
    %v2894 = vrot.slane %v2880, 4
    %v2895 = vadd.f32 %v2880, %v2894
    %v2896 = vrot.slane %v2895, 2
    %v2897 = vadd.f32 %v2895, %v2896
    %v2898 = vrot.slane %v2897, 1
    %v2899 = vadd.f32 %v2897, %v2898
    %v2900 = vrot.slane %v2881, 4
    %v2901 = vadd.f32 %v2881, %v2900
    %v2902 = vrot.slane %v2901, 2
    %v2903 = vadd.f32 %v2901, %v2902
    %v2904 = vrot.slane %v2903, 1
    %v2905 = vadd.f32 %v2903, %v2904
    %v2906 = vmul.f32 %v2887, %v618
    %v2907 = vmul.f32 %v2893, %v618
    %v2908 = vmul.f32 %v2899, %v618
    %v2909 = vmul.f32 %v2905, %v618
    %v2910 = vadd.f32 %v2906, 1e-05
    %v2911 = vadd.f32 %v2907, 1e-05
    %v2912 = vadd.f32 %v2908, 1e-05
    %v2913 = vadd.f32 %v2909, 1e-05
    %v2914 = vrsqrt.pop %v2910
    %v2915 = vmul.f32 %v2914, %v2910
    %v2916 = vmul.f32 %v2915, %v2914
    %v2917 = vmul.f32 0.5, %v2916
    %v2918 = vsub.f32 1.5, %v2917
    %v2919 = vmul.f32 %v2914, %v2918
    %vm2920 = vweird.f32 %v2910
    %vm2921 = vweird.f32 %v2914
    %vm2922 = vmor %vm2920, %vm2921
    %v2923 = vsel %vm2922, %v2914, %v2919
    %v2924 = vrsqrt.pop %v2911
    %v2925 = vmul.f32 %v2924, %v2911
    %v2926 = vmul.f32 %v2925, %v2924
    %v2927 = vmul.f32 0.5, %v2926
    %v2928 = vsub.f32 1.5, %v2927
    %v2929 = vmul.f32 %v2924, %v2928
    %vm2930 = vweird.f32 %v2911
    %vm2931 = vweird.f32 %v2924
    %vm2932 = vmor %vm2930, %vm2931
    %v2933 = vsel %vm2932, %v2924, %v2929
    %v2934 = vrsqrt.pop %v2912
    %v2935 = vmul.f32 %v2934, %v2912
    %v2936 = vmul.f32 %v2935, %v2934
    %v2937 = vmul.f32 0.5, %v2936
    %v2938 = vsub.f32 1.5, %v2937
    %v2939 = vmul.f32 %v2934, %v2938
    %vm2940 = vweird.f32 %v2912
    %vm2941 = vweird.f32 %v2934
    %vm2942 = vmor %vm2940, %vm2941
    %v2943 = vsel %vm2942, %v2934, %v2939
    %v2944 = vrsqrt.pop %v2913
    %v2945 = vmul.f32 %v2944, %v2913
    %v2946 = vmul.f32 %v2945, %v2944
    %v2947 = vmul.f32 0.5, %v2946
    %v2948 = vsub.f32 1.5, %v2947
    %v2949 = vmul.f32 %v2944, %v2948
    %vm2950 = vweird.f32 %v2913
    %vm2951 = vweird.f32 %v2944
    %vm2952 = vmor %vm2950, %vm2951
    %v2953 = vsel %vm2952, %v2944, %v2949
    %v2954 = vmul.f32 %v2874, %v2923
    %v2955 = vmul.f32 %v2875, %v2933
    %v2956 = vmul.f32 %v2876, %v2943
    %v2957 = vmul.f32 %v2877, %v2953
    %v2959 = vperm.slane %v2845, 0
    %v2960 = vperm.slane %v2845, 2
    %v2961 = vperm.slane %v2845, 4
    %v2962 = vperm.slane %v2845, 6
    %v2967 = vperm.slane %v2959, 0
    %v2968 = vperm.slane %v2960, 0
    %v2969 = vperm.slane %v2961, 0
    %v2970 = vperm.slane %v2962, 0
    %v2971 = vmul.f32 %v2954, %v2967
    %v2972 = vmul.f32 %v2955, %v2968
    %v2973 = vmul.f32 %v2956, %v2969
    %v2974 = vmul.f32 %v2957, %v2970
    %v2975 = vperm.slane %v2845, 1
    %v2976 = vperm.slane %v2845, 3
    %v2977 = vperm.slane %v2845, 5
    %v2978 = vperm.slane %v2845, 7
    %v2983 = vperm.slane %v2975, 1
    %v2984 = vperm.slane %v2976, 1
    %v2985 = vperm.slane %v2977, 1
    %v2986 = vperm.slane %v2978, 1
    %v2987 = vadd.f32 %v2971, %v2983
    %v2988 = vadd.f32 %v2972, %v2984
    %v2989 = vadd.f32 %v2973, %v2985
    %v2990 = vadd.f32 %v2974, %v2986
    %vm2991 = vcmp.gt.f32.partialorder %v2987, 0.0
    %vm2992 = vcmp.gt.f32.partialorder %v2988, 0.0
    %vm2993 = vcmp.gt.f32.partialorder %v2989, 0.0
    %vm2994 = vcmp.gt.f32.partialorder %v2990, 0.0
    %v2995 = vmul.f32 %v2987, 0.1
    %v2996 = vmul.f32 %v2988, 0.1
    %v2997 = vmul.f32 %v2989, 0.1
    %v2998 = vmul.f32 %v2990, 0.1
    %v2999 = vsel %vm2991, %v2987, %v2995
    %v3000 = vsel %vm2992, %v2988, %v2996
    %v3001 = vsel %vm2993, %v2989, %v2997
    %v3002 = vsel %vm2994, %v2990, %v2998
    %v3003 = vpack.c.bf16 %v2999, %v2999
    %v3004 = vpack.c.bf16 %v3000, %v3000
    %v3005 = vpack.c.bf16 %v3001, %v3001
    %v3006 = vpack.c.bf16 %v3002, %v3002
    %v3007 = vld [vmem:[#allocation6] sm:$0xf]
    %v3008 = vld [vmem:[#allocation6 + $0x4] sm:$0xf]
    %v3009 = vld [vmem:[#allocation6 + $0x8] sm:$0xf]
    %v3010 = vld [vmem:[#allocation6 + $0xc] sm:$0xf]
    %v3011 = vld [vmem:[#allocation6 + $0x10] sm:$0xf]
    %v3012 = vld [vmem:[#allocation6 + $0x14] sm:$0xf]
    %v3013 = vld [vmem:[#allocation6 + $0x18] sm:$0xf]
    %v3014 = vld [vmem:[#allocation6 + $0x1c] sm:$0xf]
    %v3015 = vld [vmem:[#allocation6 + $0x20] sm:$0xf]
    %v3016 = vld [vmem:[#allocation6 + $0x24] sm:$0xf]
    %v3017 = vld [vmem:[#allocation6 + $0x28] sm:$0xf]
    %v3018 = vld [vmem:[#allocation6 + $0x2c] sm:$0xf]
    %v3019 = vld [vmem:[#allocation6 + $0x30] sm:$0xf]
    %v3020 = vld [vmem:[#allocation6 + $0x34] sm:$0xf]
    %v3021 = vld [vmem:[#allocation6 + $0x38] sm:$0xf]
    %v3022 = vld [vmem:[#allocation6 + $0x3c] sm:$0xf]
    %v3023 = vld [vmem:[#allocation6 + $0x40] sm:$0xf]
    %v3024 = vld [vmem:[#allocation6 + $0x44] sm:$0xf]
    %v3025 = vld [vmem:[#allocation6 + $0x48] sm:$0xf]
    %v3026 = vld [vmem:[#allocation6 + $0x4c] sm:$0xf]
    %v3027 = vld [vmem:[#allocation6 + $0x50] sm:$0xf]
    %v3028 = vld [vmem:[#allocation6 + $0x54] sm:$0xf]
    %v3029 = vld [vmem:[#allocation6 + $0x58] sm:$0xf]
    %v3030 = vld [vmem:[#allocation6 + $0x5c] sm:$0xf]
    %v3031 = vld [vmem:[#allocation6 + $0x60] sm:$0xf]
    %v3032 = vld [vmem:[#allocation6 + $0x64] sm:$0xf]
    %v3033 = vld [vmem:[#allocation6 + $0x68] sm:$0xf]
    %v3034 = vld [vmem:[#allocation6 + $0x6c] sm:$0xf]
    %v3035 = vld [vmem:[#allocation6 + $0x70] sm:$0xf]
    %v3036 = vld [vmem:[#allocation6 + $0x74] sm:$0xf]
    %v3037 = vld [vmem:[#allocation6 + $0x78] sm:$0xf]
    %v3038 = vld [vmem:[#allocation6 + $0x7c] sm:$0xf]
    %v3039 = vld [vmem:[#allocation6 + $0x80] sm:$0xf]
    %v3040 = vld [vmem:[#allocation6 + $0x84] sm:$0xf]
    %v3041 = vld [vmem:[#allocation6 + $0x88] sm:$0xf]
    %v3042 = vld [vmem:[#allocation6 + $0x8c] sm:$0xf]
    %v3043 = vld [vmem:[#allocation6 + $0x90] sm:$0xf]
    %v3044 = vld [vmem:[#allocation6 + $0x94] sm:$0xf]
    %v3045 = vld [vmem:[#allocation6 + $0x98] sm:$0xf]
    %v3046 = vld [vmem:[#allocation6 + $0x9c] sm:$0xf]
    %v3047 = vld [vmem:[#allocation6 + $0xa0] sm:$0xf]
    %v3048 = vld [vmem:[#allocation6 + $0xa4] sm:$0xf]
    %v3049 = vld [vmem:[#allocation6 + $0xa8] sm:$0xf]
    %v3050 = vld [vmem:[#allocation6 + $0xac] sm:$0xf]
    %v3051 = vld [vmem:[#allocation6 + $0xb0] sm:$0xf]
    %v3052 = vld [vmem:[#allocation6 + $0xb4] sm:$0xf]
    %v3053 = vld [vmem:[#allocation6 + $0xb8] sm:$0xf]
    %v3054 = vld [vmem:[#allocation6 + $0xbc] sm:$0xf]
    %v3055 = vld [vmem:[#allocation6 + $0xc0] sm:$0xf]
    %v3056 = vld [vmem:[#allocation6 + $0xc4] sm:$0xf]
    %v3057 = vld [vmem:[#allocation6 + $0xc8] sm:$0xf]
    %v3058 = vld [vmem:[#allocation6 + $0xcc] sm:$0xf]
    %v3059 = vld [vmem:[#allocation6 + $0xd0] sm:$0xf]
    %v3060 = vld [vmem:[#allocation6 + $0xd4] sm:$0xf]
    %v3061 = vld [vmem:[#allocation6 + $0xd8] sm:$0xf]
    %v3062 = vld [vmem:[#allocation6 + $0xdc] sm:$0xf]
    %v3063 = vld [vmem:[#allocation6 + $0xe0] sm:$0xf]
    %v3064 = vld [vmem:[#allocation6 + $0xe4] sm:$0xf]
    %v3065 = vld [vmem:[#allocation6 + $0xe8] sm:$0xf]
    %v3066 = vld [vmem:[#allocation6 + $0xec] sm:$0xf]
    %v3067 = vld [vmem:[#allocation6 + $0xf0] sm:$0xf]
    %v3068 = vld [vmem:[#allocation6 + $0xf4] sm:$0xf]
    %v3069 = vld [vmem:[#allocation6 + $0xf8] sm:$0xf]
    %v3070 = vld [vmem:[#allocation6 + $0xfc] sm:$0xf]
    %v3071 = vld [vmem:[%s6] sm:$0x1]
    %v3073 = vperm.slane %v3071, 0
    %v3139 = vunpack.c.l.b16 %v3007
    %v3140 = vunpack.c.l.b16 %v3008
    %v3141 = vunpack.c.l.b16 %v3009
    %v3142 = vunpack.c.l.b16 %v3010
    %v3143 = vunpack.c.l.b16 %v3011
    %v3144 = vunpack.c.l.b16 %v3012
    %v3145 = vunpack.c.l.b16 %v3013
    %v3146 = vunpack.c.l.b16 %v3014
    %v3147 = vunpack.c.l.b16 %v3015
    %v3148 = vunpack.c.l.b16 %v3016
    %v3149 = vunpack.c.l.b16 %v3017
    %v3150 = vunpack.c.l.b16 %v3018
    %v3151 = vunpack.c.l.b16 %v3019
    %v3152 = vunpack.c.l.b16 %v3020
    %v3153 = vunpack.c.l.b16 %v3021
    %v3154 = vunpack.c.l.b16 %v3022
    %v3155 = vunpack.c.l.b16 %v3023
    %v3156 = vunpack.c.l.b16 %v3024
    %v3157 = vunpack.c.l.b16 %v3025
    %v3158 = vunpack.c.l.b16 %v3026
    %v3159 = vunpack.c.l.b16 %v3027
    %v3160 = vunpack.c.l.b16 %v3028
    %v3161 = vunpack.c.l.b16 %v3029
    %v3162 = vunpack.c.l.b16 %v3030
    %v3163 = vunpack.c.l.b16 %v3031
    %v3164 = vunpack.c.l.b16 %v3032
    %v3165 = vunpack.c.l.b16 %v3033
    %v3166 = vunpack.c.l.b16 %v3034
    %v3167 = vunpack.c.l.b16 %v3035
    %v3168 = vunpack.c.l.b16 %v3036
    %v3169 = vunpack.c.l.b16 %v3037
    %v3170 = vunpack.c.l.b16 %v3038
    %v3171 = vunpack.c.l.b16 %v3039
    %v3172 = vunpack.c.l.b16 %v3040
    %v3173 = vunpack.c.l.b16 %v3041
    %v3174 = vunpack.c.l.b16 %v3042
    %v3175 = vunpack.c.l.b16 %v3043
    %v3176 = vunpack.c.l.b16 %v3044
    %v3177 = vunpack.c.l.b16 %v3045
    %v3178 = vunpack.c.l.b16 %v3046
    %v3179 = vunpack.c.l.b16 %v3047
    %v3180 = vunpack.c.l.b16 %v3048
    %v3181 = vunpack.c.l.b16 %v3049
    %v3182 = vunpack.c.l.b16 %v3050
    %v3183 = vunpack.c.l.b16 %v3051
    %v3184 = vunpack.c.l.b16 %v3052
    %v3185 = vunpack.c.l.b16 %v3053
    %v3186 = vunpack.c.l.b16 %v3054
    %v3187 = vunpack.c.l.b16 %v3055
    %v3188 = vunpack.c.l.b16 %v3056
    %v3189 = vunpack.c.l.b16 %v3057
    %v3190 = vunpack.c.l.b16 %v3058
    %v3191 = vunpack.c.l.b16 %v3059
    %v3192 = vunpack.c.l.b16 %v3060
    %v3193 = vunpack.c.l.b16 %v3061
    %v3194 = vunpack.c.l.b16 %v3062
    %v3195 = vunpack.c.l.b16 %v3063
    %v3196 = vunpack.c.l.b16 %v3064
    %v3197 = vunpack.c.l.b16 %v3065
    %v3198 = vunpack.c.l.b16 %v3066
    %v3199 = vunpack.c.l.b16 %v3067
    %v3200 = vunpack.c.l.b16 %v3068
    %v3201 = vunpack.c.l.b16 %v3069
    %v3202 = vunpack.c.l.b16 %v3070
    %v3203 = vpack.c.b16 %v3140, %v3139
    %v3204 = vpack.c.b16 %v3142, %v3141
    %v3205 = vpack.c.b16 %v3144, %v3143
    %v3206 = vpack.c.b16 %v3146, %v3145
    %v3207 = vpack.c.b16 %v3148, %v3147
    %v3208 = vpack.c.b16 %v3150, %v3149
    %v3209 = vpack.c.b16 %v3152, %v3151
    %v3210 = vpack.c.b16 %v3154, %v3153
    %v3211 = vpack.c.b16 %v3156, %v3155
    %v3212 = vpack.c.b16 %v3158, %v3157
    %v3213 = vpack.c.b16 %v3160, %v3159
    %v3214 = vpack.c.b16 %v3162, %v3161
    %v3215 = vpack.c.b16 %v3164, %v3163
    %v3216 = vpack.c.b16 %v3166, %v3165
    %v3217 = vpack.c.b16 %v3168, %v3167
    %v3218 = vpack.c.b16 %v3170, %v3169
    %v3219 = vpack.c.b16 %v3172, %v3171
    %v3220 = vpack.c.b16 %v3174, %v3173
    %v3221 = vpack.c.b16 %v3176, %v3175
    %v3222 = vpack.c.b16 %v3178, %v3177
    %v3223 = vpack.c.b16 %v3180, %v3179
    %v3224 = vpack.c.b16 %v3182, %v3181
    %v3225 = vpack.c.b16 %v3184, %v3183
    %v3226 = vpack.c.b16 %v3186, %v3185
    %v3227 = vpack.c.b16 %v3188, %v3187
    %v3228 = vpack.c.b16 %v3190, %v3189
    %v3229 = vpack.c.b16 %v3192, %v3191
    %v3230 = vpack.c.b16 %v3194, %v3193
    %v3231 = vpack.c.b16 %v3196, %v3195
    %v3232 = vpack.c.b16 %v3198, %v3197
    %v3233 = vpack.c.b16 %v3200, %v3199
    %v3234 = vpack.c.b16 %v3202, %v3201
    %3267 = vmatpush.bf16.msra.mxu0 %v3210
    %3268 = vmatpush.bf16.msra.mxu0 %v3209
    %3269 = vmatpush.bf16.msra.mxu0 %v3208
    %3270 = vmatpush.bf16.msra.mxu0 %v3207
    %3271 = vmatpush.bf16.msra.mxu0 %v3206
    %3272 = vmatpush.bf16.msra.mxu0 %v3205
    %3273 = vmatpush.bf16.msra.mxu0 %v3204
    %3274 = vmatpush.bf16.msra.mxu0 %v3203
    %3275 = vmatmul.bf16.gmra.mxu0 %v3003
    %v3276 = vpop.f32.mrf.mxu0
    %v3277 = vadd.f32 %v3073, %v3276
    %v3278 = vpop.f32.mrf.mxu0
    %3279 = vdwg.mxu0
    %3280 = vmatpush.bf16.msra.mxu0 %v3218
    %3281 = vmatpush.bf16.msra.mxu0 %v3217
    %3282 = vmatpush.bf16.msra.mxu0 %v3216
    %3283 = vmatpush.bf16.msra.mxu0 %v3215
    %3284 = vmatpush.bf16.msra.mxu0 %v3214
    %3285 = vmatpush.bf16.msra.mxu0 %v3213
    %3286 = vmatpush.bf16.msra.mxu0 %v3212
    %3287 = vmatpush.bf16.msra.mxu0 %v3211
    %3288 = vmatmul.bf16.gmra.mxu0 %v3004
    %v3289 = vpop.f32.mrf.mxu0
    %v3290 = vadd.f32 %v3277, %v3289
    %v3291 = vpop.f32.mrf.mxu0
    %3292 = vdwg.mxu0
    %3293 = vmatpush.bf16.msra.mxu0 %v3226
    %3294 = vmatpush.bf16.msra.mxu0 %v3225
    %3295 = vmatpush.bf16.msra.mxu0 %v3224
    %3296 = vmatpush.bf16.msra.mxu0 %v3223
    %3297 = vmatpush.bf16.msra.mxu0 %v3222
    %3298 = vmatpush.bf16.msra.mxu0 %v3221
    %3299 = vmatpush.bf16.msra.mxu0 %v3220
    %3300 = vmatpush.bf16.msra.mxu0 %v3219
    %3301 = vmatmul.bf16.gmra.mxu0 %v3005
    %v3302 = vpop.f32.mrf.mxu0
    %v3303 = vadd.f32 %v3290, %v3302
    %v3304 = vpop.f32.mrf.mxu0
    %3305 = vdwg.mxu0
    %3306 = vmatpush.bf16.msra.mxu0 %v3234
    %3307 = vmatpush.bf16.msra.mxu0 %v3233
    %3308 = vmatpush.bf16.msra.mxu0 %v3232
    %3309 = vmatpush.bf16.msra.mxu0 %v3231
    %3310 = vmatpush.bf16.msra.mxu0 %v3230
    %3311 = vmatpush.bf16.msra.mxu0 %v3229
    %3312 = vmatpush.bf16.msra.mxu0 %v3228
    %3313 = vmatpush.bf16.msra.mxu0 %v3227
    %3314 = vmatmul.bf16.gmra.mxu0 %v3006
    %v3315 = vpop.f32.mrf.mxu0
    %v3316 = vadd.f32 %v3303, %v3315
    %v3317 = vpop.f32.mrf.mxu0
    %3318 = vdwg.mxu0
    %3319 = vst [vmem:[%s7] sm:$0xff] %v3316
    // Predicated region
    $region42: #{forward.1} parent=1 // pred_check
      _
    $region43: #{forward.1} parent=1 // pred_check_branch
      %3321 = sbr.rel (0) target = $region45
    $region44: #{forward.1} parent=1 // pred_region
      _
    $region45: #{forward.1} parent=1 // pred_fallthru
      _
    // Predicated region
    $region46: #{forward.1} parent=1 // pred_check
      _
    $region47: #{forward.1} parent=1 // pred_check_branch
      %3323 = sbr.rel (0) target = $region49
    $region48: #{forward.1} parent=1 // pred_region
      _
    $region49: #{forward.1} parent=1 // pred_fallthru
      _
    %3324 = vsyncpa [#allocation3], 1
    %3325 = vsyncpa [#allocation5], 1

</llo_original>
